<compile_context>
chip_gen: v7x
topology: tpu7x:2x2x1
jax: 0.10.0
libtpu: 0.0.40
codegen_flags: <defaults>
</compile_context>

<pallas_src>
import math
import functools

import jax
import jax.numpy as jnp
from jax import lax
from jax.experimental import pallas as pl
from jax.experimental.pallas import tpu as pltpu


def _layernorm_f32(x, w, b, eps=1e-6):
    # x: (rows, D) float32. Biased variance, f32 statistics (matches nn.LayerNorm).
    mu = jnp.mean(x, axis=-1, keepdims=True)
    xc = x - mu
    var = jnp.mean(xc * xc, axis=-1, keepdims=True)
    return xc * lax.rsqrt(var + eps) * w + b


def encoder_block_kernel(
    x_ref,      # (1, S_pad, D) bf16  full sequence for this batch element
    wqkv_ref,   # (D, 3D) bf16        pre-transposed fused QKV weight (q-scale folded in)
    bqkv_ref,   # (1, 3D) f32         fused QKV bias (q-scale folded in)
    wo_ref,     # (D, D)  bf16        pre-transposed out_proj.weight
    w1_ref,     # (D, F)  bf16        pre-transposed ffn[0].weight
    b1_ref,     # (1, F)  f32
    w2_ref,     # (F, D)  bf16        pre-transposed ffn[2].weight
    vecs_ref,   # (8, D)  f32         rows: bo, b2, ln1w, ln1b, ln2w, ln2b, pad, pad
    out_ref,    # (1, TQ, D) bf16
    q_s,        # (S_pad, D) bf16 scratch : cached Q projection
    k_s,        # (S_pad, D) bf16 scratch : cached K projection
    v_s,        # (S_pad, D) bf16 scratch : cached V projection
    *,
    num_heads: int,
    seq_len: int,   # real (unpadded) sequence length, static
    q_tile: int,    # query-row tile, static
):
    S_pad, D = x_ref.shape[1], x_ref.shape[2]
    H = num_heads
    hd = D // H
    TQ = q_tile
    q_idx = pl.program_id(1)

    # ---- once per batch element: fused QKV projection of the whole sequence ----------
    # Chunked over TQ rows so the f32 (rows, 3D) intermediate stays small.
    @pl.when(q_idx == 0)
    def _():
        @pl.loop(0, S_pad // TQ)
        def _(i):
            r = pl.ds(pl.multiple_of(i * TQ, TQ), TQ)
            xin = x_ref[0, r, :]                                            # (TQ, D) bf16
            qkv = jnp.dot(xin, wqkv_ref[...],
                          preferred_element_type=jnp.float32) + bqkv_ref[0]  # (TQ, 3D) f32
            q_s[r, :] = qkv[:, :D].astype(jnp.bfloat16)
            k_s[r, :] = qkv[:, D:2 * D].astype(jnp.bfloat16)
            v_s[r, :] = qkv[:, 2 * D:].astype(jnp.bfloat16)

    # ---- per query-row tile --------------------------------------------------------
    rq = pl.ds(pl.multiple_of(q_idx * TQ, TQ), TQ)
    xq = x_ref[0, rq, :]                              # (TQ, D) bf16  residual source

    # NOTE: hd < 128 under-fills MXU lanes on the score matmul and the head-major
    # relayout below costs XLU traffic; prefer head_dim >= 128 at production sizes.
    qh = q_s[rq, :].reshape(TQ, H, hd)                # bf16, scale already folded in
    kh = k_s[...].reshape(S_pad, H, hd)
    vh = v_s[...].reshape(S_pad, H, hd)

    # Batched-over-heads q.k^T, f32 accumulation, no explicit transpose of K.
    s = jnp.einsum("qhe,khe->hqk", qh, kh,
                   preferred_element_type=jnp.float32)                    # (H, TQ, S_pad)
    if S_pad != seq_len:  # static: mask padded keys out of the softmax
        key_ids = lax.broadcasted_iota(jnp.int32, (1, 1, S_pad), 2)
        s = jnp.where(key_ids < seq_len, s, -1e30)

    # Softmax over keys, f32 statistics; divide -> EUP approximate reciprocal.
    m = jnp.max(s, axis=-1, keepdims=True)
    p = jnp.exp(s - m)
    inv = pl.reciprocal(jnp.sum(p, axis=-1, keepdims=True), approx=True)
    p_b = (p * inv).astype(jnp.bfloat16)

    # Batched P.V over heads, written into (TQ, H, hd) -> (TQ, D) (PyTorch concat order).
    ctx = jnp.einsum("hqk,khe->qhe", p_b, vh,
                     preferred_element_type=jnp.float32)
    ctx = ctx.reshape(TQ, D).astype(jnp.bfloat16)

    bo = vecs_ref[0]
    b2 = vecs_ref[1]
    ln1w = vecs_ref[2]
    ln1b = vecs_ref[3]
    ln2w = vecs_ref[4]
    ln2b = vecs_ref[5]

    attn = jnp.dot(ctx, wo_ref[...], preferred_element_type=jnp.float32) + bo  # (TQ, D)

    # dropout_1: identity (eval semantics)
    out1 = _layernorm_f32(xq.astype(jnp.float32) + attn, ln1w, ln1b)

    # --- FFN (Linear -> ReLU -> Linear), bf16 MXU operands, f32 accumulation ---
    h1 = jnp.dot(out1.astype(jnp.bfloat16), w1_ref[...],
                 preferred_element_type=jnp.float32) + b1_ref[0]                 # (TQ, F)
    h1 = jnp.maximum(h1, 0.0).astype(jnp.bfloat16)
    ffn = jnp.dot(h1, w2_ref[...], preferred_element_type=jnp.float32) + b2      # (TQ, D)

    # dropout_2: identity (eval semantics)
    out2 = _layernorm_f32(out1 + ffn, ln2w, ln2b)
    out_ref[0] = out2.astype(out_ref.dtype)


def _device_defaults():
    """(q_tile, vmem_limit_bytes) per TPU generation."""
    try:
        kind = jax.devices()[0].device_kind.lower()
    except Exception:
        kind = ""
    if "v6" in kind:
        return 256, 100 * 1024 * 1024   # v6e: 2x256 MXU M dim, 128 MiB physical VMEM
    if "v5" in kind:
        return 128, 100 * 1024 * 1024   # v5e: 128 MXU M dim, 128 MiB physical VMEM
    return 128, 48 * 1024 * 1024        # v7x / unknown: 64 MiB physical VMEM


def encoder_block(x, p, num_heads, q_tile=None, vmem_limit=None):
    """Apply one TransformerEncoderBlock with a Pallas kernel. x: (B, S, D); returns bf16."""
    B, S, D = x.shape
    F = p["w1"].shape[1]                 # w1 is pre-transposed (D, F)
    dq, dv = _device_defaults()
    if q_tile is None:
        q_tile = dq
    if vmem_limit is None:
        vmem_limit = dv

    x = x.astype(jnp.bfloat16)           # bf16 activation stream (halves DMA / VMEM)
    if S <= q_tile:
        TQ, S_pad = S, S
    else:
        TQ = q_tile
        S_pad = int(pl.cdiv(S, TQ)) * TQ
        if S_pad != S:                   # pad + in-kernel key masking (no q_tile=S blowup)
            x = jnp.pad(x, ((0, 0), (0, S_pad - S), (0, 0)))
    nq = S_pad // TQ

    def _const_spec(shape):
        # Constant block index -> DMA'd once; single-buffered (no double-buffer VMEM waste).
        nd = len(shape)
        return pl.BlockSpec(shape, lambda b, q, _nd=nd: (0,) * _nd,
                            pipeline_mode=pl.Buffered(1))

    kernel = functools.partial(encoder_block_kernel,
                               num_heads=num_heads, seq_len=S, q_tile=TQ)

    out = pl.pallas_call(
        kernel,
        out_shape=jax.ShapeDtypeStruct((B, S_pad, D), jnp.bfloat16),
        grid_spec=pltpu.PrefetchScalarGridSpec(
            num_scalar_prefetch=0,
            grid=(B, nq),
            in_specs=[
                # Full sequence block per batch element; query rows are sliced from it
                # inside the kernel (no second tiled activation stream).
                pl.BlockSpec((1, S_pad, D), lambda b, q: (b, 0, 0)),
                _const_spec((D, 3 * D)),   # wqkv (fused, pre-transposed, bf16)
                _const_spec((1, 3 * D)),   # bqkv
                _const_spec((D, D)),       # wo
                _const_spec((D, F)),       # w1
                _const_spec((1, F)),       # b1
                _const_spec((F, D)),       # w2
                _const_spec((8, D)),       # packed bo, b2, ln1w, ln1b, ln2w, ln2b
            ],
            out_specs=pl.BlockSpec((1, TQ, D), lambda b, q: (b, q, 0)),
            scratch_shapes=[
                pltpu.VMEM((S_pad, D), jnp.bfloat16),   # cached Q projection
                pltpu.VMEM((S_pad, D), jnp.bfloat16),   # cached K projection
                pltpu.VMEM((S_pad, D), jnp.bfloat16),   # cached V projection
            ],
        ),
        compiler_params=pltpu.CompilerParams(
            # q axis MUST be "arbitrary": the K/V scratch filled at q==0 is reused by
            # later q tiles of the same batch element.  Batch stays parallel (megacore).
            dimension_semantics=("parallel", "arbitrary"),
            vmem_limit_bytes=vmem_limit,
        ),
    )(x, p["wqkv"], p["bqkv"], p["wo"], p["w1"], p["b1"], p["w2"], p["vecs"])

    if S_pad != S:
        out = out[:, :S, :]
    return out


def init_params(key, vocab_size, embed_dim, max_length, num_layers, ff_dim):
    """PyTorch-convention parameters (Linear weight: (out_features, in_features), f32)."""
    keys = jax.random.split(key, 2 + num_layers)
    tok_emb = jax.random.normal(keys[0], (vocab_size, embed_dim), jnp.float32) * 0.02
    pos_emb = jax.random.normal(keys[1], (max_length, embed_dim), jnp.float32) * 0.02

    layers = []
    for i in range(num_layers):
        k = jax.random.split(keys[2 + i], 6)
        layers.append(dict(
            wqkv=jax.random.normal(k[0], (3 * embed_dim, embed_dim), jnp.float32) * 0.02,
            bqkv=jnp.zeros((3 * embed_dim,), jnp.float32),
            wo=jax.random.normal(k[1], (embed_dim, embed_dim), jnp.float32) * 0.02,
            bo=jnp.zeros((embed_dim,), jnp.float32),
            w1=jax.random.normal(k[2], (ff_dim, embed_dim), jnp.float32) * 0.02,
            b1=jax.random.normal(k[3], (ff_dim,), jnp.float32) * 0.02,
            w2=jax.random.normal(k[4], (embed_dim, ff_dim), jnp.float32) * 0.02,
            b2=jax.random.normal(k[5], (embed_dim,), jnp.float32) * 0.02,
            ln1w=jnp.ones((embed_dim,), jnp.float32),
            ln1b=jnp.zeros((embed_dim,), jnp.float32),
            ln2w=jnp.ones((embed_dim,), jnp.float32),
            ln2b=jnp.zeros((embed_dim,), jnp.float32),
        ))
    return tok_emb, pos_emb, layers


def prepare_layer_params(p, num_heads):
    """PyTorch layout -> kernel layout.

    Fused, pre-transposed (in, out) bf16 QKV weight with 1/sqrt(head_dim) folded into the
    Q columns / Q bias; pre-transposed bf16 wo/w1/w2; biases + LN params packed in f32.
    """
    D = p["wo"].shape[0]
    F = p["w1"].shape[0]
    hd = D // num_heads
    scale = 1.0 / math.sqrt(hd)
    wq, wk, wv = jnp.split(p["wqkv"], 3, axis=0)       # each (D, D) in (out, in) layout
    bq, bk, bv = jnp.split(p["bqkv"], 3)
    f32 = jnp.float32

    wqkv = jnp.concatenate([wq.T * scale, wk.T, wv.T], axis=1)          # (D, 3D)
    bqkv = jnp.concatenate([bq * scale, bk, bv]).reshape(1, 3 * D)      # (1, 3D)

    vecs = jnp.zeros((8, D), f32)
    vecs = vecs.at[0].set(p["bo"]).at[1].set(p["b2"]) \
               .at[2].set(p["ln1w"]).at[3].set(p["ln1b"]) \
               .at[4].set(p["ln2w"]).at[5].set(p["ln2b"])

    return dict(
        wqkv=wqkv.astype(jnp.bfloat16),
        bqkv=bqkv.astype(f32),
        wo=p["wo"].T.astype(jnp.bfloat16),
        w1=p["w1"].T.astype(jnp.bfloat16),
        b1=p["b1"].reshape(1, F).astype(f32),
        w2=p["w2"].T.astype(jnp.bfloat16),
        vecs=vecs,
    )


def stack_layers(prepared_list):
    return jax.tree_util.tree_map(lambda *xs: jnp.stack(xs, axis=0), *prepared_list)


def transformer_encoder(token_ids, tok_emb, pos_emb, stacked_layers, *, num_heads):
    """token_ids: (B, S) int32. Returns (B, S, D) float32."""
    B, S = token_ids.shape
    # TokenAndPositionEmbedding: token + position embedding (gather stays in XLA glue).
    x = jnp.take(tok_emb, token_ids, axis=0) + pos_emb[:S][None, :, :]
    x = x.astype(jnp.bfloat16)     # bf16 residual stream between layers

    def step(xc, layer_p):
        return encoder_block(xc, layer_p, num_heads), None

    x, _ = jax.lax.scan(step, x, stacked_layers)
    return x.astype(jnp.float32)


if __name__ == "__main__":
    # Small, forward-consistent shapes.
    vocab_size = 100
    embed_dim = 32
    max_length = 16
    num_layers = 2
    num_heads = 4
    ff_dim = 64
    B, S = 2, 8

    key = jax.random.PRNGKey(0)
    k_ids, k_params = jax.random.split(key)
    token_ids = jax.random.randint(k_ids, (B, S), 0, vocab_size, dtype=jnp.int32)
    tok_emb, pos_emb, layers = init_params(
        k_params, vocab_size, embed_dim, max_length, num_layers, ff_dim
    )
    stacked = stack_layers([prepare_layer_params(p, num_heads) for p in layers])

    fwd = jax.jit(functools.partial(transformer_encoder, num_heads=num_heads))
    out = fwd(token_ids, tok_emb, pos_emb, stacked)
    out = jax.block_until_ready(out)
    assert out.shape == (B, S, embed_dim)
    assert bool(jnp.all(jnp.isfinite(out)))
    print("KERNEL_OK")
</pallas_src>

<mosaic_0001>
module attributes {stable_mosaic.version = 11 : i64} {
  func.func @encoder_block_kernel(%arg0: i32, %arg1: i32, %arg2: memref<1x8x32xbf16, #tpu.memory_space<vmem>>, %arg3: memref<32x96xbf16, #tpu.memory_space<vmem>>, %arg4: memref<1x96xf32, #tpu.memory_space<vmem>>, %arg5: memref<32x32xbf16, #tpu.memory_space<vmem>>, %arg6: memref<32x64xbf16, #tpu.memory_space<vmem>>, %arg7: memref<1x64xf32, #tpu.memory_space<vmem>>, %arg8: memref<64x32xbf16, #tpu.memory_space<vmem>>, %arg9: memref<8x32xf32, #tpu.memory_space<vmem>>, %arg10: memref<1x8x32xbf16, #tpu.memory_space<vmem>>, %arg11: memref<8x32xbf16, #tpu.memory_space<vmem>>, %arg12: memref<8x32xbf16, #tpu.memory_space<vmem>>, %arg13: memref<8x32xbf16, #tpu.memory_space<vmem>>) attributes {dimension_semantics = [#tpu.dimension_semantics<parallel>, #tpu.dimension_semantics<arbitrary>], iteration_bounds = array<i64: 2, 1>, scalar_prefetch = 0 : i64, scratch_operands = 3 : i64, tpu.core_type = #tpu.core_type<tc>, window_params = [{transform_indices = @transform_0, window_bounds = array<i64: 1, 8, 32>}, {pipeline_mode = #tpu.pipeline_mode<synchronous>, transform_indices = @transform_1, window_bounds = array<i64: 32, 96>}, {pipeline_mode = #tpu.pipeline_mode<synchronous>, transform_indices = @transform_2, window_bounds = array<i64: 1, 96>}, {pipeline_mode = #tpu.pipeline_mode<synchronous>, transform_indices = @transform_3, window_bounds = array<i64: 32, 32>}, {pipeline_mode = #tpu.pipeline_mode<synchronous>, transform_indices = @transform_4, window_bounds = array<i64: 32, 64>}, {pipeline_mode = #tpu.pipeline_mode<synchronous>, transform_indices = @transform_5, window_bounds = array<i64: 1, 64>}, {pipeline_mode = #tpu.pipeline_mode<synchronous>, transform_indices = @transform_6, window_bounds = array<i64: 64, 32>}, {pipeline_mode = #tpu.pipeline_mode<synchronous>, transform_indices = @transform_7, window_bounds = array<i64: 8, 32>}, {transform_indices = @transform_8, window_bounds = array<i64: 1, 8, 32>}]} {
    %c0_i32 = arith.constant 0 : i32
    %0 = arith.cmpi eq, %arg1, %c0_i32 : i32
    %1 = arith.extui %0 : i1 to i32
    %c0_i32_0 = arith.constant 0 : i32
    %2 = arith.cmpi ne, %1, %c0_i32_0 : i32
    scf.if %2 {
      %c0_i32_42 = arith.constant 0 : i32
      %c1_i32 = arith.constant 1 : i32
      %115 = arith.muli %c0_i32_42, %c1_i32 : i32
      %c0_i32_43 = arith.constant 0 : i32
      %116 = arith.addi %c0_i32_43, %115 : i32
      %c8_i32_44 = arith.constant 8 : i32
      %117 = arith.muli %116, %c8_i32_44 : i32
      %118 = tpu.assume_multiple %117, 8 : i32
      %c0_45 = arith.constant 0 : index
      %119 = arith.index_cast %118 : i32 to index
      %c0_46 = arith.constant 0 : index
      %120 = vector.load %arg2[%c0_45, %119, %c0_46] : memref<1x8x32xbf16, #tpu.memory_space<vmem>>, vector<1x8x32xbf16>
      %121 = vector.shape_cast %120 : vector<1x8x32xbf16> to vector<8x32xbf16>
      %c0_47 = arith.constant 0 : index
      %c0_48 = arith.constant 0 : index
      %122 = vector.load %arg3[%c0_47, %c0_48] : memref<32x96xbf16, #tpu.memory_space<vmem>>, vector<32x96xbf16>
      %cst_49 = arith.constant dense<0.000000e+00> : vector<8x96xf32>
      %123 = tpu.matmul %121, %122, %cst_49 {dimension_numbers = #tpu.dot_dimension_numbers<[1], [0], [0], [1], [0, 0, 1, 1], [], []>} : vector<8x32xbf16>, vector<32x96xbf16>, vector<8x96xf32> -> vector<8x96xf32>
      %c0_50 = arith.constant 0 : index
      %c0_51 = arith.constant 0 : index
      %124 = vector.load %arg4[%c0_50, %c0_51] : memref<1x96xf32, #tpu.memory_space<vmem>>, vector<1x96xf32>
      %125 = vector.shape_cast %124 : vector<1x96xf32> to vector<96xf32>
      %126 = vector.shape_cast %125 : vector<96xf32> to vector<1x96xf32>
      %127 = vector.broadcast %126 : vector<1x96xf32> to vector<8x96xf32>
      %128 = arith.addf %123, %127 : vector<8x96xf32>
      %129 = vector.extract_strided_slice %128 {offsets = [0, 0], sizes = [8, 32], strides = [1, 1]} : vector<8x96xf32> to vector<8x32xf32>
      %130 = arith.truncf %129 : vector<8x32xf32> to vector<8x32xbf16>
      %131 = arith.index_cast %118 : i32 to index
      %c0_52 = arith.constant 0 : index
      %132 = vector.load %arg11[%131, %c0_52] : memref<8x32xbf16, #tpu.memory_space<vmem>>, vector<8x32xbf16>
      tpu.vector_store %arg11[%131, %c0_52], %130 {strides = array<i32>} : memref<8x32xbf16, #tpu.memory_space<vmem>>, vector<8x32xbf16>,
      %133 = vector.extract_strided_slice %128 {offsets = [0, 32], sizes = [8, 32], strides = [1, 1]} : vector<8x96xf32> to vector<8x32xf32>
      %134 = arith.truncf %133 : vector<8x32xf32> to vector<8x32xbf16>
      %135 = arith.index_cast %118 : i32 to index
      %c0_53 = arith.constant 0 : index
      %136 = vector.load %arg12[%135, %c0_53] : memref<8x32xbf16, #tpu.memory_space<vmem>>, vector<8x32xbf16>
      tpu.vector_store %arg12[%135, %c0_53], %134 {strides = array<i32>} : memref<8x32xbf16, #tpu.memory_space<vmem>>, vector<8x32xbf16>,
      %137 = vector.extract_strided_slice %128 {offsets = [0, 64], sizes = [8, 32], strides = [1, 1]} : vector<8x96xf32> to vector<8x32xf32>
      %138 = arith.truncf %137 : vector<8x32xf32> to vector<8x32xbf16>
      %139 = arith.index_cast %118 : i32 to index
      %c0_54 = arith.constant 0 : index
      %140 = vector.load %arg13[%139, %c0_54] : memref<8x32xbf16, #tpu.memory_space<vmem>>, vector<8x32xbf16>
      tpu.vector_store %arg13[%139, %c0_54], %138 {strides = array<i32>} : memref<8x32xbf16, #tpu.memory_space<vmem>>, vector<8x32xbf16>,
      %c1_i32_55 = arith.constant 1 : i32
    } else {
    }
    %c8_i32 = arith.constant 8 : i32
    %3 = arith.muli %arg1, %c8_i32 : i32
    %4 = tpu.assume_multiple %3, 8 : i32
    %c0 = arith.constant 0 : index
    %5 = arith.index_cast %4 : i32 to index
    %c0_1 = arith.constant 0 : index
    %6 = vector.load %arg2[%c0, %5, %c0_1] : memref<1x8x32xbf16, #tpu.memory_space<vmem>>, vector<1x8x32xbf16>
    %7 = vector.shape_cast %6 : vector<1x8x32xbf16> to vector<8x32xbf16>
    %8 = arith.index_cast %4 : i32 to index
    %c0_2 = arith.constant 0 : index
    %9 = vector.load %arg11[%8, %c0_2] : memref<8x32xbf16, #tpu.memory_space<vmem>>, vector<8x32xbf16>
    %10 = vector.shape_cast %9 : vector<8x32xbf16> to vector<8x4x8xbf16>
    %c0_3 = arith.constant 0 : index
    %c0_4 = arith.constant 0 : index
    %11 = vector.load %arg12[%c0_3, %c0_4] : memref<8x32xbf16, #tpu.memory_space<vmem>>, vector<8x32xbf16>
    %12 = vector.shape_cast %11 : vector<8x32xbf16> to vector<8x4x8xbf16>
    %c0_5 = arith.constant 0 : index
    %c0_6 = arith.constant 0 : index
    %13 = vector.load %arg13[%c0_5, %c0_6] : memref<8x32xbf16, #tpu.memory_space<vmem>>, vector<8x32xbf16>
    %14 = vector.shape_cast %13 : vector<8x32xbf16> to vector<8x4x8xbf16>
    "tpu.trace_start"() <{level = 10 : i32, message = "qhe,khe->hqk"}> : () -> ()
    %cst = arith.constant dense<0.000000e+00> : vector<4x8x8xf32>
    %15 = tpu.matmul %10, %12, %cst {dimension_numbers = #tpu.dot_dimension_numbers<[2], [2], [0], [0], [0, 1, 0, 0, 1, 0], [1], [1]>} : vector<8x4x8xbf16>, vector<8x4x8xbf16>, vector<4x8x8xf32> -> vector<4x8x8xf32>
    "tpu.trace_stop"() : () -> ()
    %cst_7 = arith.constant dense<0xFF800000> : vector<4x8xf32>
    %16 = vector.multi_reduction <maximumf>, %15, %cst_7 [2] : vector<4x8x8xf32> to vector<4x8xf32>
    %17 = vector.shape_cast %16 : vector<4x8xf32> to vector<4x8x1xf32>
    %18 = vector.broadcast %17 : vector<4x8x1xf32> to vector<4x8x8xf32>
    %19 = arith.subf %15, %18 : vector<4x8x8xf32>
    %20 = math.exp %19 : vector<4x8x8xf32>
    %cst_8 = arith.constant dense<0.000000e+00> : vector<4x8xf32>
    %21 = vector.multi_reduction <add>, %20, %cst_8 [2] : vector<4x8x8xf32> to vector<4x8xf32>
    %22 = vector.shape_cast %21 : vector<4x8xf32> to vector<4x8x1xf32>
    %23 = tpu.reciprocal %22 {approx = true} : vector<4x8x1xf32> -> vector<4x8x1xf32>
    %24 = vector.broadcast %23 : vector<4x8x1xf32> to vector<4x8x8xf32>
    %25 = arith.mulf %20, %24 : vector<4x8x8xf32>
    %26 = arith.truncf %25 : vector<4x8x8xf32> to vector<4x8x8xbf16>
    "tpu.trace_start"() <{level = 10 : i32, message = "hqk,khe->qhe"}> : () -> ()
    %cst_9 = arith.constant dense<0.000000e+00> : vector<4x8x8xf32>
    %27 = tpu.matmul %14, %26, %cst_9 {dimension_numbers = #tpu.dot_dimension_numbers<[0], [2], [2], [1], [0, 1, 0, 2, 1, 1], [1], [0]>} : vector<8x4x8xbf16>, vector<4x8x8xbf16>, vector<4x8x8xf32> -> vector<4x8x8xf32>
    %28 = tpu.transpose %27, [2, 0, 1] : vector<4x8x8xf32> -> vector<8x4x8xf32>
    "tpu.trace_stop"() : () -> ()
    %29 = vector.shape_cast %28 : vector<8x4x8xf32> to vector<8x32xf32>
    %30 = arith.truncf %29 : vector<8x32xf32> to vector<8x32xbf16>
    %c0_10 = arith.constant 0 : index
    %c0_11 = arith.constant 0 : index
    %31 = vector.load %arg9[%c0_10, %c0_11] : memref<8x32xf32, #tpu.memory_space<vmem>>, vector<1x32xf32>
    %32 = vector.shape_cast %31 : vector<1x32xf32> to vector<32xf32>
    %c1 = arith.constant 1 : index
    %c0_12 = arith.constant 0 : index
    %33 = vector.load %arg9[%c1, %c0_12] : memref<8x32xf32, #tpu.memory_space<vmem>>, vector<1x32xf32>
    %34 = vector.shape_cast %33 : vector<1x32xf32> to vector<32xf32>
    %c2 = arith.constant 2 : index
    %c0_13 = arith.constant 0 : index
    %35 = vector.load %arg9[%c2, %c0_13] : memref<8x32xf32, #tpu.memory_space<vmem>>, vector<1x32xf32>
    %36 = vector.shape_cast %35 : vector<1x32xf32> to vector<32xf32>
    %c3 = arith.constant 3 : index
    %c0_14 = arith.constant 0 : index
    %37 = vector.load %arg9[%c3, %c0_14] : memref<8x32xf32, #tpu.memory_space<vmem>>, vector<1x32xf32>
    %38 = vector.shape_cast %37 : vector<1x32xf32> to vector<32xf32>
    %c4 = arith.constant 4 : index
    %c0_15 = arith.constant 0 : index
    %39 = vector.load %arg9[%c4, %c0_15] : memref<8x32xf32, #tpu.memory_space<vmem>>, vector<1x32xf32>
    %40 = vector.shape_cast %39 : vector<1x32xf32> to vector<32xf32>
    %c5 = arith.constant 5 : index
    %c0_16 = arith.constant 0 : index
    %41 = vector.load %arg9[%c5, %c0_16] : memref<8x32xf32, #tpu.memory_space<vmem>>, vector<1x32xf32>
    %42 = vector.shape_cast %41 : vector<1x32xf32> to vector<32xf32>
    %c0_17 = arith.constant 0 : index
    %c0_18 = arith.constant 0 : index
    %43 = vector.load %arg5[%c0_17, %c0_18] : memref<32x32xbf16, #tpu.memory_space<vmem>>, vector<32x32xbf16>
    %cst_19 = arith.constant dense<0.000000e+00> : vector<8x32xf32>
    %44 = tpu.matmul %30, %43, %cst_19 {dimension_numbers = #tpu.dot_dimension_numbers<[1], [0], [0], [1], [0, 0, 1, 1], [], []>} : vector<8x32xbf16>, vector<32x32xbf16>, vector<8x32xf32> -> vector<8x32xf32>
    %45 = vector.shape_cast %32 : vector<32xf32> to vector<1x32xf32>
    %46 = vector.broadcast %45 : vector<1x32xf32> to vector<8x32xf32>
    %47 = arith.addf %44, %46 : vector<8x32xf32>
    %48 = arith.extf %7 : vector<8x32xbf16> to vector<8x32xf32>
    %49 = arith.addf %48, %47 : vector<8x32xf32>
    %cst_20 = arith.constant dense<0.000000e+00> : vector<8xf32>
    %50 = vector.multi_reduction <add>, %49, %cst_20 [1] : vector<8x32xf32> to vector<8xf32>
    %51 = vector.shape_cast %50 : vector<8xf32> to vector<8x1xf32>
    %cst_21 = arith.constant 3.200000e+01 : f32
    %52 = vector.broadcast %cst_21 : f32 to vector<8x1xf32>
    %53 = arith.divf %51, %52 : vector<8x1xf32>
    %54 = vector.broadcast %53 : vector<8x1xf32> to vector<8x32xf32>
    %55 = arith.subf %49, %54 : vector<8x32xf32>
    %56 = arith.mulf %55, %55 : vector<8x32xf32>
    %cst_22 = arith.constant dense<0.000000e+00> : vector<8xf32>
    %57 = vector.multi_reduction <add>, %56, %cst_22 [1] : vector<8x32xf32> to vector<8xf32>
    %58 = vector.shape_cast %57 : vector<8xf32> to vector<8x1xf32>
    %cst_23 = arith.constant 3.200000e+01 : f32
    %59 = vector.broadcast %cst_23 : f32 to vector<8x1xf32>
    %60 = arith.divf %58, %59 : vector<8x1xf32>
    %cst_24 = arith.constant 9.99999997E-7 : f32
    %61 = vector.broadcast %cst_24 : f32 to vector<8x1xf32>
    %62 = arith.addf %60, %61 : vector<8x1xf32>
    %63 = math.rsqrt %62 : vector<8x1xf32>
    %64 = vector.broadcast %63 : vector<8x1xf32> to vector<8x32xf32>
    %65 = arith.mulf %55, %64 : vector<8x32xf32>
    %66 = vector.shape_cast %36 : vector<32xf32> to vector<1x32xf32>
    %67 = vector.broadcast %66 : vector<1x32xf32> to vector<8x32xf32>
    %68 = arith.mulf %65, %67 : vector<8x32xf32>
    %69 = vector.shape_cast %38 : vector<32xf32> to vector<1x32xf32>
    %70 = vector.broadcast %69 : vector<1x32xf32> to vector<8x32xf32>
    %71 = arith.addf %68, %70 : vector<8x32xf32>
    %72 = arith.truncf %71 : vector<8x32xf32> to vector<8x32xbf16>
    %c0_25 = arith.constant 0 : index
    %c0_26 = arith.constant 0 : index
    %73 = vector.load %arg6[%c0_25, %c0_26] : memref<32x64xbf16, #tpu.memory_space<vmem>>, vector<32x64xbf16>
    %cst_27 = arith.constant dense<0.000000e+00> : vector<8x64xf32>
    %74 = tpu.matmul %72, %73, %cst_27 {dimension_numbers = #tpu.dot_dimension_numbers<[1], [0], [0], [1], [0, 0, 1, 1], [], []>} : vector<8x32xbf16>, vector<32x64xbf16>, vector<8x64xf32> -> vector<8x64xf32>
    %c0_28 = arith.constant 0 : index
    %c0_29 = arith.constant 0 : index
    %75 = vector.load %arg7[%c0_28, %c0_29] : memref<1x64xf32, #tpu.memory_space<vmem>>, vector<1x64xf32>
    %76 = vector.shape_cast %75 : vector<1x64xf32> to vector<64xf32>
    %77 = vector.shape_cast %76 : vector<64xf32> to vector<1x64xf32>
    %78 = vector.broadcast %77 : vector<1x64xf32> to vector<8x64xf32>
    %79 = arith.addf %74, %78 : vector<8x64xf32>
    %cst_30 = arith.constant 0.000000e+00 : f32
    %80 = vector.broadcast %cst_30 : f32 to vector<8x64xf32>
    %81 = arith.maximumf %79, %80 : vector<8x64xf32>
    %82 = arith.truncf %81 : vector<8x64xf32> to vector<8x64xbf16>
    %c0_31 = arith.constant 0 : index
    %c0_32 = arith.constant 0 : index
    %83 = vector.load %arg8[%c0_31, %c0_32] : memref<64x32xbf16, #tpu.memory_space<vmem>>, vector<64x32xbf16>
    %cst_33 = arith.constant dense<0.000000e+00> : vector<8x32xf32>
    %84 = tpu.matmul %82, %83, %cst_33 {dimension_numbers = #tpu.dot_dimension_numbers<[1], [0], [0], [1], [0, 0, 1, 1], [], []>} : vector<8x64xbf16>, vector<64x32xbf16>, vector<8x32xf32> -> vector<8x32xf32>
    %85 = vector.shape_cast %34 : vector<32xf32> to vector<1x32xf32>
    %86 = vector.broadcast %85 : vector<1x32xf32> to vector<8x32xf32>
    %87 = arith.addf %84, %86 : vector<8x32xf32>
    %88 = arith.addf %71, %87 : vector<8x32xf32>
    %cst_34 = arith.constant dense<0.000000e+00> : vector<8xf32>
    %89 = vector.multi_reduction <add>, %88, %cst_34 [1] : vector<8x32xf32> to vector<8xf32>
    %90 = vector.shape_cast %89 : vector<8xf32> to vector<8x1xf32>
    %cst_35 = arith.constant 3.200000e+01 : f32
    %91 = vector.broadcast %cst_35 : f32 to vector<8x1xf32>
    %92 = arith.divf %90, %91 : vector<8x1xf32>
    %93 = vector.broadcast %92 : vector<8x1xf32> to vector<8x32xf32>
    %94 = arith.subf %88, %93 : vector<8x32xf32>
    %95 = arith.mulf %94, %94 : vector<8x32xf32>
    %cst_36 = arith.constant dense<0.000000e+00> : vector<8xf32>
    %96 = vector.multi_reduction <add>, %95, %cst_36 [1] : vector<8x32xf32> to vector<8xf32>
    %97 = vector.shape_cast %96 : vector<8xf32> to vector<8x1xf32>
    %cst_37 = arith.constant 3.200000e+01 : f32
    %98 = vector.broadcast %cst_37 : f32 to vector<8x1xf32>
    %99 = arith.divf %97, %98 : vector<8x1xf32>
    %cst_38 = arith.constant 9.99999997E-7 : f32
    %100 = vector.broadcast %cst_38 : f32 to vector<8x1xf32>
    %101 = arith.addf %99, %100 : vector<8x1xf32>
    %102 = math.rsqrt %101 : vector<8x1xf32>
    %103 = vector.broadcast %102 : vector<8x1xf32> to vector<8x32xf32>
    %104 = arith.mulf %94, %103 : vector<8x32xf32>
    %105 = vector.shape_cast %40 : vector<32xf32> to vector<1x32xf32>
    %106 = vector.broadcast %105 : vector<1x32xf32> to vector<8x32xf32>
    %107 = arith.mulf %104, %106 : vector<8x32xf32>
    %108 = vector.shape_cast %42 : vector<32xf32> to vector<1x32xf32>
    %109 = vector.broadcast %108 : vector<1x32xf32> to vector<8x32xf32>
    %110 = arith.addf %107, %109 : vector<8x32xf32>
    %111 = arith.truncf %110 : vector<8x32xf32> to vector<8x32xbf16>
    %c0_39 = arith.constant 0 : index
    %c0_40 = arith.constant 0 : index
    %c0_41 = arith.constant 0 : index
    %112 = vector.load %arg10[%c0_39, %c0_40, %c0_41] : memref<1x8x32xbf16, #tpu.memory_space<vmem>>, vector<1x8x32xbf16>
    %113 = vector.shape_cast %112 : vector<1x8x32xbf16> to vector<8x32xbf16>
    %114 = vector.shape_cast %111 : vector<8x32xbf16> to vector<1x8x32xbf16>
    tpu.vector_store %arg10[%c0_39, %c0_40, %c0_41], %114 {strides = array<i32>} : memref<1x8x32xbf16, #tpu.memory_space<vmem>>, vector<1x8x32xbf16>,
    return
  }
  func.func @transform_0(%arg0: i32, %arg1: i32) -> (i32, i32, i32) {
    %c0_i32 = arith.constant 0 : i32
    %c0_i32_0 = arith.constant 0 : i32
    %c0_i32_1 = arith.constant 0 : i32
    return %arg0, %c0_i32, %c0_i32_0 : i32, i32, i32
  }
  func.func @transform_1(%arg0: i32, %arg1: i32) -> (i32, i32) {
    %c0_i32 = arith.constant 0 : i32
    %c0_i32_0 = arith.constant 0 : i32
    %c0_i32_1 = arith.constant 0 : i32
    return %c0_i32, %c0_i32_0 : i32, i32
  }
  func.func @transform_2(%arg0: i32, %arg1: i32) -> (i32, i32) {
    %c0_i32 = arith.constant 0 : i32
    %c0_i32_0 = arith.constant 0 : i32
    %c0_i32_1 = arith.constant 0 : i32
    return %c0_i32, %c0_i32_0 : i32, i32
  }
  func.func @transform_3(%arg0: i32, %arg1: i32) -> (i32, i32) {
    %c0_i32 = arith.constant 0 : i32
    %c0_i32_0 = arith.constant 0 : i32
    %c0_i32_1 = arith.constant 0 : i32
    return %c0_i32, %c0_i32_0 : i32, i32
  }
  func.func @transform_4(%arg0: i32, %arg1: i32) -> (i32, i32) {
    %c0_i32 = arith.constant 0 : i32
    %c0_i32_0 = arith.constant 0 : i32
    %c0_i32_1 = arith.constant 0 : i32
    return %c0_i32, %c0_i32_0 : i32, i32
  }
  func.func @transform_5(%arg0: i32, %arg1: i32) -> (i32, i32) {
    %c0_i32 = arith.constant 0 : i32
    %c0_i32_0 = arith.constant 0 : i32
    %c0_i32_1 = arith.constant 0 : i32
    return %c0_i32, %c0_i32_0 : i32, i32
  }
  func.func @transform_6(%arg0: i32, %arg1: i32) -> (i32, i32) {
    %c0_i32 = arith.constant 0 : i32
    %c0_i32_0 = arith.constant 0 : i32
    %c0_i32_1 = arith.constant 0 : i32
    return %c0_i32, %c0_i32_0 : i32, i32
  }
  func.func @transform_7(%arg0: i32, %arg1: i32) -> (i32, i32) {
    %c0_i32 = arith.constant 0 : i32
    %c0_i32_0 = arith.constant 0 : i32
    %c0_i32_1 = arith.constant 0 : i32
    return %c0_i32, %c0_i32_0 : i32, i32
  }
  func.func @transform_8(%arg0: i32, %arg1: i32) -> (i32, i32, i32) {
    %c0_i32 = arith.constant 0 : i32
    %c0_i32_0 = arith.constant 0 : i32
    return %arg0, %arg1, %c0_i32 : i32, i32, i32
  }
}

</mosaic_0001>

<llo_original>
// kernel: closed_call.4
$region0: #{closed_call.4}
  #allocation0 [shape = 'u32[]', space=smem, size = 0x4, offset = 0x4, fixed_abs, tag = 'smem constant byte address 0x4 - core index']
  #allocation1 [shape = 'u32[144,128]{1,0:T(1,128)}', space=vmem, size = 0x12000, scoped, tag = 'internal scratch']
  #allocation2 [shape = 'bf16[8,32]{1,0:T(8,128)(2,1)}', space=vmem, size = 0x800, scoped, tag = 'scratch operand']
  #allocation3 [shape = 'bf16[8,32]{1,0:T(8,128)(2,1)}', space=vmem, size = 0x800, scoped, tag = 'scratch operand']
  #allocation4 [shape = 'bf16[8,32]{1,0:T(8,128)(2,1)}', space=vmem, size = 0x800, scoped, tag = 'scratch operand']
  %s0 = inlined_call_operand.vmem [shape: bf16[2,8,32], index: 0, kind: input, shape index: {}]
  %s1 = inlined_call_operand.vmem [shape: bf16[32,96], index: 1, kind: input, shape index: {}]
  %s2 = inlined_call_operand.vmem [shape: f32[1,96], index: 2, kind: input, shape index: {}]
  %s3 = inlined_call_operand.vmem [shape: bf16[32,32], index: 3, kind: input, shape index: {}]
  %s4 = inlined_call_operand.vmem [shape: bf16[32,64], index: 4, kind: input, shape index: {}]
  %s5 = inlined_call_operand.vmem [shape: f32[1,64], index: 5, kind: input, shape index: {}]
  %s6 = inlined_call_operand.vmem [shape: bf16[64,32], index: 6, kind: input, shape index: {}]
  %s7 = inlined_call_operand.vmem [shape: f32[8,32], index: 7, kind: input, shape index: {}]
  %s8 = inlined_call_operand.vmem [shape: bf16[2,8,32], index: 8, kind: output, shape index: {}]
  %s9 = sld [smem:[#allocation0]]
  $region69: #{closed_call.4} parent=0
    _
  %s11 = ssub.s32 1, %s9
  %s12 = scalar_select 0, %s11, %s9
  loop: start=0, step=1, limit=4
  $region2: #{closed_call.4} parent=0 // loop_pre_header
    _
  $region3: #{closed_call.4} parent=0 // loop_header
    %s14 = sphi 0, %s18
    %p15 = scmp.ge.s32.totalorder %s14, 4
    %s21 = sphi 0, %s33
    %s22 = sphi 0, %s29
    %s23 = sphi 0, %s21
    %s24 = sphi 0, %s22
    %s25 = sphi 0, %s23
    %s26 = sphi 0, %s24
    %s36 = sphi 0, %s38
    %s39 = sphi 0, %s36
    %s40 = sphi 0, %s39
    %s56 = sphi 0, %s40
    %s60 = sphi 0, %s60
    %s62 = sphi 0, %s60
    %s63 = sphi 0, %s62
    %s77 = sphi 0, %s63
    %s81 = sphi 0, %s81
    %s83 = sphi 0, %s81
    %s84 = sphi 0, %s83
    %s98 = sphi 0, %s84
    %s102 = sphi 0, %s102
    %s104 = sphi 0, %s102
    %s105 = sphi 0, %s104
    %s119 = sphi 0, %s105
    %s123 = sphi 0, %s123
    %s125 = sphi 0, %s123
    %s126 = sphi 0, %s125
    %s140 = sphi 0, %s126
    %s144 = sphi 0, %s144
    %s146 = sphi 0, %s144
    %s147 = sphi 0, %s146
    %s161 = sphi 0, %s147
    %s165 = sphi 0, %s165
    %s167 = sphi 0, %s165
    %s168 = sphi 0, %s167
    %s182 = sphi 0, %s168
    %s186 = sphi 0, %s186
    %s188 = sphi 0, %s186
    %s189 = sphi 0, %s188
    %s203 = sphi 0, %s189
    %s211 = sphi 0, %s213
    %s214 = sphi 0, %s211
    %s215 = sphi 0, %s214
    %s231 = sphi 0, %s215
  $region4: #{closed_call.4} parent=0 // loop_header_branch
    %17 = sbr.rel (%p15) target = $region8
  $region5: #{closed_call.4} parent=0 // loop_body
    %s19 = ssub.s32 %s14, 1
    %s20 = ssub.s32 %s14, 2
    %s27 = sadd.s32 1, %s22
    %p28 = scmp.ge.s32.totalorder %s27, 1
    %s29 = scalar_select %p28, 0, %s27
    %s30 = sadd.s32 1, %s21
    %s31 = scalar_select %p28, %s30, %s21
    %p32 = scmp.ge.s32.totalorder %s31, 2
    %s33 = scalar_select %p32, 0, %s31
    %s34 = ssub.s32 %s21, %s33
    %p35 = scmp.eq.s32.totalorder %s34, 0
    %s37 = sadd.s32 %s36, 1
    %s38 = scalar_select %p35, %s36, %s37
    %p41 = pneg %p35
    %p42 = scmp.eq.s32.totalorder %s14, 1
    %p43 = por %p41, %p42
    %p44 = scmp.ne.s32.totalorder %s36, %s39
    %p45 = scmp.eq.s32.totalorder %s14, 0
    %p46 = por %p44, %p45
    %p47 = scmp.ne.s32.totalorder %s36, %s39
    %p48 = scmp.eq.s32.totalorder %s19, 1
    %p49 = por %p47, %p48
    %p50 = scmp.ne.s32.totalorder %s39, %s40
    %p51 = scmp.eq.s32.totalorder %s19, 0
    %p52 = por %p50, %p51
    %p53 = scmp.ne.s32.totalorder %s39, %s40
    %p54 = scmp.eq.s32.totalorder %s20, 1
    %p55 = por %p53, %p54
    %p57 = scmp.ne.s32.totalorder %s40, %s56
    %p58 = scmp.eq.s32.totalorder %s20, 0
    %p59 = por %p57, %p58
    %s61 = sadd.s32 %s60, 1
    %p64 = scmp.eq.s32.totalorder %s14, 1
    %p65 = scmp.ne.s32.totalorder %s60, %s62
    %p66 = scmp.eq.s32.totalorder %s14, 0
    %p67 = por %p65, %p66
    %p68 = scmp.ne.s32.totalorder %s60, %s62
    %p69 = scmp.eq.s32.totalorder %s19, 1
    %p70 = por %p68, %p69
    %p71 = scmp.ne.s32.totalorder %s62, %s63
    %p72 = scmp.eq.s32.totalorder %s19, 0
    %p73 = por %p71, %p72
    %p74 = scmp.ne.s32.totalorder %s62, %s63
    %p75 = scmp.eq.s32.totalorder %s20, 1
    %p76 = por %p74, %p75
    %p78 = scmp.ne.s32.totalorder %s63, %s77
    %p79 = scmp.eq.s32.totalorder %s20, 0
    %p80 = por %p78, %p79
    %s82 = sadd.s32 %s81, 1
    %p85 = scmp.eq.s32.totalorder %s14, 1
    %p86 = scmp.ne.s32.totalorder %s81, %s83
    %p87 = scmp.eq.s32.totalorder %s14, 0
    %p88 = por %p86, %p87
    %p89 = scmp.ne.s32.totalorder %s81, %s83
    %p90 = scmp.eq.s32.totalorder %s19, 1
    %p91 = por %p89, %p90
    %p92 = scmp.ne.s32.totalorder %s83, %s84
    %p93 = scmp.eq.s32.totalorder %s19, 0
    %p94 = por %p92, %p93
    %p95 = scmp.ne.s32.totalorder %s83, %s84
    %p96 = scmp.eq.s32.totalorder %s20, 1
    %p97 = por %p95, %p96
    %p99 = scmp.ne.s32.totalorder %s84, %s98
    %p100 = scmp.eq.s32.totalorder %s20, 0
    %p101 = por %p99, %p100
    %s103 = sadd.s32 %s102, 1
    %p106 = scmp.eq.s32.totalorder %s14, 1
    %p107 = scmp.ne.s32.totalorder %s102, %s104
    %p108 = scmp.eq.s32.totalorder %s14, 0
    %p109 = por %p107, %p108
    %p110 = scmp.ne.s32.totalorder %s102, %s104
    %p111 = scmp.eq.s32.totalorder %s19, 1
    %p112 = por %p110, %p111
    %p113 = scmp.ne.s32.totalorder %s104, %s105
    %p114 = scmp.eq.s32.totalorder %s19, 0
    %p115 = por %p113, %p114
    %p116 = scmp.ne.s32.totalorder %s104, %s105
    %p117 = scmp.eq.s32.totalorder %s20, 1
    %p118 = por %p116, %p117
    %p120 = scmp.ne.s32.totalorder %s105, %s119
    %p121 = scmp.eq.s32.totalorder %s20, 0
    %p122 = por %p120, %p121
    %s124 = sadd.s32 %s123, 1
    %p127 = scmp.eq.s32.totalorder %s14, 1
    %p128 = scmp.ne.s32.totalorder %s123, %s125
    %p129 = scmp.eq.s32.totalorder %s14, 0
    %p130 = por %p128, %p129
    %p131 = scmp.ne.s32.totalorder %s123, %s125
    %p132 = scmp.eq.s32.totalorder %s19, 1
    %p133 = por %p131, %p132
    %p134 = scmp.ne.s32.totalorder %s125, %s126
    %p135 = scmp.eq.s32.totalorder %s19, 0
    %p136 = por %p134, %p135
    %p137 = scmp.ne.s32.totalorder %s125, %s126
    %p138 = scmp.eq.s32.totalorder %s20, 1
    %p139 = por %p137, %p138
    %p141 = scmp.ne.s32.totalorder %s126, %s140
    %p142 = scmp.eq.s32.totalorder %s20, 0
    %p143 = por %p141, %p142
    %s145 = sadd.s32 %s144, 1
    %p148 = scmp.eq.s32.totalorder %s14, 1
    %p149 = scmp.ne.s32.totalorder %s144, %s146
    %p150 = scmp.eq.s32.totalorder %s14, 0
    %p151 = por %p149, %p150
    %p152 = scmp.ne.s32.totalorder %s144, %s146
    %p153 = scmp.eq.s32.totalorder %s19, 1
    %p154 = por %p152, %p153
    %p155 = scmp.ne.s32.totalorder %s146, %s147
    %p156 = scmp.eq.s32.totalorder %s19, 0
    %p157 = por %p155, %p156
    %p158 = scmp.ne.s32.totalorder %s146, %s147
    %p159 = scmp.eq.s32.totalorder %s20, 1
    %p160 = por %p158, %p159
    %p162 = scmp.ne.s32.totalorder %s147, %s161
    %p163 = scmp.eq.s32.totalorder %s20, 0
    %p164 = por %p162, %p163
    %s166 = sadd.s32 %s165, 1
    %p169 = scmp.eq.s32.totalorder %s14, 1
    %p170 = scmp.ne.s32.totalorder %s165, %s167
    %p171 = scmp.eq.s32.totalorder %s14, 0
    %p172 = por %p170, %p171
    %p173 = scmp.ne.s32.totalorder %s165, %s167
    %p174 = scmp.eq.s32.totalorder %s19, 1
    %p175 = por %p173, %p174
    %p176 = scmp.ne.s32.totalorder %s167, %s168
    %p177 = scmp.eq.s32.totalorder %s19, 0
    %p178 = por %p176, %p177
    %p179 = scmp.ne.s32.totalorder %s167, %s168
    %p180 = scmp.eq.s32.totalorder %s20, 1
    %p181 = por %p179, %p180
    %p183 = scmp.ne.s32.totalorder %s168, %s182
    %p184 = scmp.eq.s32.totalorder %s20, 0
    %p185 = por %p183, %p184
    %s187 = sadd.s32 %s186, 1
    %p190 = scmp.eq.s32.totalorder %s14, 1
    %p191 = scmp.ne.s32.totalorder %s186, %s188
    %p192 = scmp.eq.s32.totalorder %s14, 0
    %p193 = por %p191, %p192
    %p194 = scmp.ne.s32.totalorder %s186, %s188
    %p195 = scmp.eq.s32.totalorder %s19, 1
    %p196 = por %p194, %p195
    %p197 = scmp.ne.s32.totalorder %s188, %s189
    %p198 = scmp.eq.s32.totalorder %s19, 0
    %p199 = por %p197, %p198
    %p200 = scmp.ne.s32.totalorder %s188, %s189
    %p201 = scmp.eq.s32.totalorder %s20, 1
    %p202 = por %p200, %p201
    %p204 = scmp.ne.s32.totalorder %s189, %s203
    %p205 = scmp.eq.s32.totalorder %s20, 0
    %p206 = por %p204, %p205
    %s207 = ssub.s32 %s21, %s33
    %s208 = ssub.s32 %s22, %s29
    %s209 = sor.u32 %s207, %s208
    %p210 = scmp.eq.s32.totalorder %s209, 0
    %s212 = sadd.s32 %s211, 1
    %s213 = scalar_select %p210, %s211, %s212
    %p216 = pneg %p210
    %p217 = scmp.eq.s32.totalorder %s14, 1
    %p218 = por %p216, %p217
    %p219 = scmp.ne.s32.totalorder %s211, %s214
    %p220 = scmp.eq.s32.totalorder %s14, 0
    %p221 = por %p219, %p220
    %p222 = scmp.ne.s32.totalorder %s211, %s214
    %p223 = scmp.eq.s32.totalorder %s19, 1
    %p224 = por %p222, %p223
    %p225 = scmp.ne.s32.totalorder %s214, %s215
    %p226 = scmp.eq.s32.totalorder %s19, 0
    %p227 = por %p225, %p226
    %p228 = scmp.ne.s32.totalorder %s214, %s215
    %p229 = scmp.eq.s32.totalorder %s20, 1
    %p230 = por %p228, %p229
    %p232 = scmp.ne.s32.totalorder %s215, %s231
    %p233 = scmp.eq.s32.totalorder %s20, 0
    %p234 = por %p232, %p233
    %p235 = scmp.le.s32.totalorder 1, %s14
    %p236 = scmp.lt.s32.totalorder %s14, 3
    %p237 = pnand %p235, %p236
    %p238 = pneg %p237
    // Predicated region
    $region9: #{closed_call.4} parent=5 // pred_check
      _
    $region10: #{closed_call.4} parent=5 // pred_check_branch
      %240 = sbr.rel (%p237) target = $region12
    $region11: #{closed_call.4} parent=5 // pred_region
      %s241 = ssub.s32 %s14, 1
      // Predicated region
      $region13: #{closed_call.4} parent=11 // pred_check
        %p242 = pneg %p73
      $region14: #{closed_call.4} parent=11 // pred_check_branch
        %244 = sbr.rel (%p242) target = $region16
      $region15: #{closed_call.4} parent=11 // pred_region
        _
      $region16: #{closed_call.4} parent=11 // pred_fallthru
        _
      // Predicated region
      $region17: #{closed_call.4} parent=11 // pred_check
        %p245 = pneg %p94
      $region18: #{closed_call.4} parent=11 // pred_check_branch
        %247 = sbr.rel (%p245) target = $region20
      $region19: #{closed_call.4} parent=11 // pred_region
        _
      $region20: #{closed_call.4} parent=11 // pred_fallthru
        _
      // Predicated region
      $region21: #{closed_call.4} parent=11 // pred_check
        %p248 = pneg %p115
      $region22: #{closed_call.4} parent=11 // pred_check_branch
        %250 = sbr.rel (%p248) target = $region24
      $region23: #{closed_call.4} parent=11 // pred_region
        _
      $region24: #{closed_call.4} parent=11 // pred_fallthru
        _
      // Predicated region
      $region25: #{closed_call.4} parent=11 // pred_check
        %p251 = pneg %p136
      $region26: #{closed_call.4} parent=11 // pred_check_branch
        %253 = sbr.rel (%p251) target = $region28
      $region27: #{closed_call.4} parent=11 // pred_region
        _
      $region28: #{closed_call.4} parent=11 // pred_fallthru
        _
      // Predicated region
      $region29: #{closed_call.4} parent=11 // pred_check
        %p254 = pneg %p157
      $region30: #{closed_call.4} parent=11 // pred_check_branch
        %256 = sbr.rel (%p254) target = $region32
      $region31: #{closed_call.4} parent=11 // pred_region
        _
      $region32: #{closed_call.4} parent=11 // pred_fallthru
        _
      // Predicated region
      $region33: #{closed_call.4} parent=11 // pred_check
        %p257 = pneg %p178
      $region34: #{closed_call.4} parent=11 // pred_check_branch
        %259 = sbr.rel (%p257) target = $region36
      $region35: #{closed_call.4} parent=11 // pred_region
        _
      $region36: #{closed_call.4} parent=11 // pred_fallthru
        _
      // Predicated region
      $region37: #{closed_call.4} parent=11 // pred_check
        %p260 = pneg %p199
      $region38: #{closed_call.4} parent=11 // pred_check_branch
        %262 = sbr.rel (%p260) target = $region40
      $region39: #{closed_call.4} parent=11 // pred_region
        _
      $region40: #{closed_call.4} parent=11 // pred_fallthru
        _
    $region12: #{closed_call.4} parent=5 // pred_fallthru
      _
    %p263 = scmp.lt.s32.totalorder %s14, 2
    // Predicated region
    $region41: #{closed_call.4} parent=5 // pred_check
      %p264 = pneg %p263
    $region42: #{closed_call.4} parent=5 // pred_check_branch
      %266 = sbr.rel (%p264) target = $region44
    $region43: #{closed_call.4} parent=5 // pred_region
      // Predicated region
      $region45: #{closed_call.4} parent=43 // pred_check
        %p267 = pneg %p46
      $region46: #{closed_call.4} parent=43 // pred_check_branch
        %269 = sbr.rel (%p267) target = $region48
      $region47: #{closed_call.4} parent=43 // pred_region
        %p270 = scmp.lt.s32.totalorder %s21, 1
        %s271 = scalar_select %p270, %s21, 1
        %s272 = smul.addr %s271, 4
        %s273 = scalar_lea.vmem %s0, %s272
      $region48: #{closed_call.4} parent=43 // pred_fallthru
        _
    $region44: #{closed_call.4} parent=5 // pred_fallthru
      _
    %p274 = scmp.le.s32.totalorder 1, %s14
    %p275 = scmp.lt.s32.totalorder %s14, 3
    %p276 = pnand %p274, %p275
    %p277 = pneg %p276
    // Predicated region
    $region49: #{closed_call.4} parent=5 // pred_check
      _
    $region50: #{closed_call.4} parent=5 // pred_check_branch
      %279 = sbr.rel (%p276) target = $region52
    $region51: #{closed_call.4} parent=5 // pred_region
      %s280 = ssub.s32 %s14, 1
      %p281 = scmp.lt.s32.totalorder %s23, 1
      %s282 = scalar_select %p281, %s23, 1
      %s283 = smul.addr %s282, 4
      %s284 = scalar_lea.vmem %s0, %s283
      %p285 = pneg %p52
      %p286 = pneg %p49
      %p287 = pneg %p73
      %p288 = pneg %p70
      %p289 = pneg %p94
      %p290 = pneg %p91
      %p291 = pneg %p115
      %p292 = pneg %p112
      %p293 = pneg %p136
      %p294 = pneg %p133
      %p295 = pneg %p157
      %p296 = pneg %p154
      %p297 = pneg %p178
      %p298 = pneg %p175
      %p299 = pneg %p199
      %p300 = pneg %p196
      %p301 = pneg %p227
      %p302 = pneg %p224
      %p303 = scmp.lt.s32.totalorder %s23, 1
      %s304 = scalar_select %p303, %s23, 1
      %p305 = scmp.lt.s32.totalorder %s24, 0
      %s306 = scalar_select %p305, %s24, 0
      %s307 = sadd.s32 %s306, %s304
      %s308 = smul.addr %s307, 4
      %s309 = scalar_lea.vmem %s8, %s308
      %p310 = scmp.lt.s32.totalorder %s23, 1
      %s311 = scalar_select %p310, %s23, 1
      %s312 = smul.addr %s311, 4
      %s313 = scalar_lea.vmem %s0, %s312
      %p314 = scmp.lt.s32.totalorder %s23, 1
      %s315 = scalar_select %p314, %s23, 1
      %p316 = scmp.lt.s32.totalorder %s24, 0
      %s317 = scalar_select %p316, %s24, 0
      %s318 = sadd.s32 %s317, %s315
      %s319 = smul.addr %s318, 4
      %s320 = scalar_lea.vmem %s8, %s319
      %p322 = scmp.eq.s32.totalorder %s24, 0
      // Predicated region
      $region53: #{closed_call.4} parent=51 // pred_check
        %p323 = pneg %p322
      $region54: #{closed_call.4} parent=51 // pred_check_branch
        %325 = sbr.rel (%p323) target = $region56
      $region55: #{closed_call.4} parent=51 // pred_region
        %v326 = vld [vmem:[%s313] sm:$0xf]
        %v327 = vld [vmem:[%s1] sm:$0xf]
        %v328 = vld [vmem:[%s1 + $0x4] sm:$0xf]
        %v329 = vld [vmem:[%s1 + $0x8] sm:$0xf]
        %v330 = vld [vmem:[%s1 + $0xc] sm:$0xf]
        %v331 = vld [vmem:[%s2] sm:$0x1]
        %v333 = vlaneseq
        %v334 = vshrl.u32 %v333, 7
        %v335 = vsub.s32 0, %v334
        %v336 = vrot.slane %v331, %v335
        %v342 = vunpack.c.l.b16 %v327
        %v343 = vunpack.c.l.b16 %v328
        %v344 = vunpack.c.l.b16 %v329
        %v345 = vunpack.c.l.b16 %v330
        %v346 = vpack.c.b16 %v343, %v342
        %v347 = vpack.c.b16 %v345, %v344
        %vm350 = vcmask 261120
        %v352 = vsel %vm350, %v326, 0
        %354 = vmatprep.subr.bf16.mxu0 0
        %355 = vmatpush1.bf16.msra.mxu0 %v346
        %356 = vmatprep.subr.bf16.mxu0 0
        %357 = vmatpush1.bf16.msra.mxu0 %v347
        %358 = vmatprep.subr.bf16.mxu0 0
        %359 = vmatpush1.bf16.msra.mxu0 0
        %360 = vmatprep.subr.bf16.mxu0 0
        %361 = vmatpush1.bf16.msra.mxu0 0
        %362 = vmatprep.subr.bf16.mxu0 0
        %363 = vmatpush1.bf16.msra.mxu0 0
        %364 = vmatprep.subr.bf16.mxu0 0
        %365 = vmatpush1.bf16.msra.mxu0 0
        %366 = vmatprep.subr.bf16.mxu0 0
        %367 = vmatpush1.bf16.msra.mxu0 0
        %368 = vmatprep.subr.bf16.mxu0 0
        %369 = vmatpush1.bf16.msra.mxu0 0
        %370 = vmatprep.subr.bf16.mxu0 0
        %371 = vmatpush1.bf16.msra.mxu0 0
        %372 = vmatprep.subr.bf16.mxu0 0
        %373 = vmatpush1.bf16.msra.mxu0 0
        %374 = vmatprep.subr.bf16.mxu0 0
        %375 = vmatpush1.bf16.msra.mxu0 0
        %376 = vmatprep.subr.bf16.mxu0 0
        %377 = vmatpush1.bf16.msra.mxu0 0
        %378 = vmatprep.subr.bf16.mxu0 0
        %379 = vmatpush1.bf16.msra.mxu0 0
        %380 = vmatprep.subr.bf16.mxu0 0
        %381 = vmatpush1.bf16.msra.mxu0 0
        %382 = vmatprep.subr.bf16.mxu0 0
        %383 = vmatpush1.bf16.msra.mxu0 0
        %384 = vmatprep.subr.bf16.mxu0 0
        %385 = vmatpush1.bf16.msra.mxu0 0
        %386 = vmatprep.mubr.bf16.mxu0 0
        %387 = vmatmul.mubr.bf16.gmra.mrb[0].mxu0 %v352
        %v388 = vpop.f32.mrb[0].mxu0
        %v389 = vadd.f32 %v336, %v388
        %v390 = vpop.f32.mrb[0].mxu0
        %v391 = vpop.f32.mrb[0].mxu0
        %v392 = vpop.f32.mrb[0].mxu0
        %393 = vdwg.mxu0
        %v394 = vpack.c.bf16 %v389, %v389
        %vm395 = vcmask 257024
        %396 = vst.msk [vmem:[#allocation2] sm:$0xf] %vm395, %v394
        %v398 = vunpack.c.l.b16 %v394
        %v399 = vpack.c.b16 %v398, %v398
        %400 = vrot.lane.b32.xlu0 %v399, 96
        %v401 = vpop.permute.xlu0 %400
        %403 = vst.msk [vmem:[#allocation3] sm:$0xf] %vm395, %v401
        %404 = vrot.lane.b32.xlu0 %v399, 64
        %v405 = vpop.permute.xlu0 %404
        %407 = vst.msk [vmem:[#allocation4] sm:$0xf] %vm395, %v405
      $region56: #{closed_call.4} parent=51 // pred_fallthru
        _
      %s408 = smul.u32 %s24, 8
      %s409 = sshra.s32 %s408, 3
      %s410 = sand.u32 %s408, 7
      %s411 = smul.addr %s409, 4
      %s412 = scalar_lea.vmem %s313, %s411
      %v413 = vld [vmem:[%s412] sm:$0xf]
      %s414 = smul.addr %s409, 4
      %s415 = scalar_lea.vmem [#allocation2], %s414
      %v416 = vld [vmem:[%s415] sm:$0xf]
      %418 = vrot.lane.b32.xlu0 %v416, 120
      %v419 = vpop.permute.xlu0 %418
      %420 = vrot.lane.b32.xlu0 %v416, 112
      %v421 = vpop.permute.xlu0 %420
      %422 = vrot.lane.b32.xlu0 %v416, 104
      %v423 = vpop.permute.xlu0 %422
      %v424 = vld [vmem:[#allocation3] sm:$0xf]
      %426 = vrot.lane.b32.xlu0 %v424, 120
      %v427 = vpop.permute.xlu0 %426
      %429 = vrot.lane.b32.xlu0 %v424, 112
      %v430 = vpop.permute.xlu0 %429
      %432 = vrot.lane.b32.xlu0 %v424, 104
      %v433 = vpop.permute.xlu0 %432
      %v435 = vld [vmem:[#allocation4] sm:$0xf]
      %437 = vrot.lane.b32.xlu0 %v435, 120
      %v438 = vpop.permute.xlu0 %437
      %440 = vrot.lane.b32.xlu0 %v435, 112
      %v441 = vpop.permute.xlu0 %440
      %443 = vrot.lane.b32.xlu0 %v435, 104
      %v444 = vpop.permute.xlu0 %443
      %446 = vxpose.xlu0.c.b16.start [1/8] %v424, 128
      %447 = vxpose.xlu0.c.b16.cont [2/8] 0, 128
      %448 = vxpose.xlu0.c.b16.cont [3/8] 0, 128
      %449 = vxpose.xlu0.c.b16.cont [4/8] 0, 128
      %450 = vxpose.xlu0.c.b16.cont [5/8] 0, 128
      %451 = vxpose.xlu0.c.b16.cont [6/8] 0, 128
      %452 = vxpose.xlu0.c.b16.cont [7/8] 0, 128
      %453 = vxpose.xlu0.c.b16.end [8/8] 0, 128
      %v454 = vpop.trf.xlu0
      %v455 = vpop.trf.xlu0
      %v456 = vpop.trf.xlu0
      %v457 = vpop.trf.xlu0
      %v458 = vpop.trf.xlu0
      %v459 = vpop.trf.xlu0
      %v460 = vpop.trf.xlu0
      %v461 = vpop.trf.xlu0
      %462 = vxpose.xlu0.c.b16.start [1/8] %v427, 128
      %463 = vxpose.xlu0.c.b16.cont [2/8] 0, 128
      %464 = vxpose.xlu0.c.b16.cont [3/8] 0, 128
      %465 = vxpose.xlu0.c.b16.cont [4/8] 0, 128
      %466 = vxpose.xlu0.c.b16.cont [5/8] 0, 128
      %467 = vxpose.xlu0.c.b16.cont [6/8] 0, 128
      %468 = vxpose.xlu0.c.b16.cont [7/8] 0, 128
      %469 = vxpose.xlu0.c.b16.end [8/8] 0, 128
      %v470 = vpop.trf.xlu0
      %v471 = vpop.trf.xlu0
      %v472 = vpop.trf.xlu0
      %v473 = vpop.trf.xlu0
      %v474 = vpop.trf.xlu0
      %v475 = vpop.trf.xlu0
      %v476 = vpop.trf.xlu0
      %v477 = vpop.trf.xlu0
      %478 = vxpose.xlu0.c.b16.start [1/8] %v430, 128
      %479 = vxpose.xlu0.c.b16.cont [2/8] 0, 128
      %480 = vxpose.xlu0.c.b16.cont [3/8] 0, 128
      %481 = vxpose.xlu0.c.b16.cont [4/8] 0, 128
      %482 = vxpose.xlu0.c.b16.cont [5/8] 0, 128
      %483 = vxpose.xlu0.c.b16.cont [6/8] 0, 128
      %484 = vxpose.xlu0.c.b16.cont [7/8] 0, 128
      %485 = vxpose.xlu0.c.b16.end [8/8] 0, 128
      %v486 = vpop.trf.xlu0
      %v487 = vpop.trf.xlu0
      %v488 = vpop.trf.xlu0
      %v489 = vpop.trf.xlu0
      %v490 = vpop.trf.xlu0
      %v491 = vpop.trf.xlu0
      %v492 = vpop.trf.xlu0
      %v493 = vpop.trf.xlu0
      %494 = vxpose.xlu0.c.b16.start [1/8] %v433, 128
      %495 = vxpose.xlu0.c.b16.cont [2/8] 0, 128
      %496 = vxpose.xlu0.c.b16.cont [3/8] 0, 128
      %497 = vxpose.xlu0.c.b16.cont [4/8] 0, 128
      %498 = vxpose.xlu0.c.b16.cont [5/8] 0, 128
      %499 = vxpose.xlu0.c.b16.cont [6/8] 0, 128
      %500 = vxpose.xlu0.c.b16.cont [7/8] 0, 128
      %501 = vxpose.xlu0.c.b16.end [8/8] 0, 128
      %v502 = vpop.trf.xlu0
      %v503 = vpop.trf.xlu0
      %v504 = vpop.trf.xlu0
      %v505 = vpop.trf.xlu0
      %v506 = vpop.trf.xlu0
      %v507 = vpop.trf.xlu0
      %v508 = vpop.trf.xlu0
      %v509 = vpop.trf.xlu0
      %vm510 = vcmask 64512
      %v512 = vsel %vm510, %v416, 0
      %vm514 = vcmask 1043456
      %v516 = vsel %vm514, %v454, 0
      %518 = vmatprep.subr.bf16.mxu0 0
      %519 = vmatpush1.bf16.msra.mxu0 %v516
      %520 = vmatprep.subr.bf16.mxu0 0
      %521 = vmatpush1.bf16.msra.mxu0 0
      %522 = vmatprep.subr.bf16.mxu0 0
      %523 = vmatpush1.bf16.msra.mxu0 0
      %524 = vmatprep.subr.bf16.mxu0 0
      %525 = vmatpush1.bf16.msra.mxu0 0
      %526 = vmatprep.subr.bf16.mxu0 0
      %527 = vmatpush1.bf16.msra.mxu0 0
      %528 = vmatprep.subr.bf16.mxu0 0
      %529 = vmatpush1.bf16.msra.mxu0 0
      %530 = vmatprep.subr.bf16.mxu0 0
      %531 = vmatpush1.bf16.msra.mxu0 0
      %532 = vmatprep.subr.bf16.mxu0 0
      %533 = vmatpush1.bf16.msra.mxu0 0
      %534 = vmatprep.subr.bf16.mxu0 0
      %535 = vmatpush1.bf16.msra.mxu0 0
      %536 = vmatprep.subr.bf16.mxu0 0
      %537 = vmatpush1.bf16.msra.mxu0 0
      %538 = vmatprep.subr.bf16.mxu0 0
      %539 = vmatpush1.bf16.msra.mxu0 0
      %540 = vmatprep.subr.bf16.mxu0 0
      %541 = vmatpush1.bf16.msra.mxu0 0
      %542 = vmatprep.subr.bf16.mxu0 0
      %543 = vmatpush1.bf16.msra.mxu0 0
      %544 = vmatprep.subr.bf16.mxu0 0
      %545 = vmatpush1.bf16.msra.mxu0 0
      %546 = vmatprep.subr.bf16.mxu0 0
      %547 = vmatpush1.bf16.msra.mxu0 0
      %548 = vmatprep.subr.bf16.mxu0 0
      %549 = vmatpush1.bf16.msra.mxu0 0
      %550 = vmatprep.mubr.bf16.mxu0 0
      %551 = vmatmul.mubr.bf16.gmra.mrb[0].mxu0 %v512
      %v552 = vpop.f32.mrb[0].mxu0
      %v553 = vadd.f32 0.0, %v552
      %v554 = vpop.f32.mrb[0].mxu0
      %v555 = vpop.f32.mrb[0].mxu0
      %v556 = vpop.f32.mrb[0].mxu0
      %557 = vdwg.mxu0
      %v559 = vsel %vm510, %v419, 0
      %v562 = vsel %vm514, %v470, 0
      %564 = vmatprep.subr.bf16.mxu0 0
      %565 = vmatpush1.bf16.msra.mxu0 %v562
      %566 = vmatprep.subr.bf16.mxu0 0
      %567 = vmatpush1.bf16.msra.mxu0 0
      %568 = vmatprep.subr.bf16.mxu0 0
      %569 = vmatpush1.bf16.msra.mxu0 0
      %570 = vmatprep.subr.bf16.mxu0 0
      %571 = vmatpush1.bf16.msra.mxu0 0
      %572 = vmatprep.subr.bf16.mxu0 0
      %573 = vmatpush1.bf16.msra.mxu0 0
      %574 = vmatprep.subr.bf16.mxu0 0
      %575 = vmatpush1.bf16.msra.mxu0 0
      %576 = vmatprep.subr.bf16.mxu0 0
      %577 = vmatpush1.bf16.msra.mxu0 0
      %578 = vmatprep.subr.bf16.mxu0 0
      %579 = vmatpush1.bf16.msra.mxu0 0
      %580 = vmatprep.subr.bf16.mxu0 0
      %581 = vmatpush1.bf16.msra.mxu0 0
      %582 = vmatprep.subr.bf16.mxu0 0
      %583 = vmatpush1.bf16.msra.mxu0 0
      %584 = vmatprep.subr.bf16.mxu0 0
      %585 = vmatpush1.bf16.msra.mxu0 0
      %586 = vmatprep.subr.bf16.mxu0 0
      %587 = vmatpush1.bf16.msra.mxu0 0
      %588 = vmatprep.subr.bf16.mxu0 0
      %589 = vmatpush1.bf16.msra.mxu0 0
      %590 = vmatprep.subr.bf16.mxu0 0
      %591 = vmatpush1.bf16.msra.mxu0 0
      %592 = vmatprep.subr.bf16.mxu0 0
      %593 = vmatpush1.bf16.msra.mxu0 0
      %594 = vmatprep.subr.bf16.mxu0 0
      %595 = vmatpush1.bf16.msra.mxu0 0
      %596 = vmatprep.mubr.bf16.mxu0 0
      %597 = vmatmul.mubr.bf16.gmra.mrb[0].mxu0 %v559
      %v598 = vpop.f32.mrb[0].mxu0
      %v599 = vadd.f32 0.0, %v598
      %v600 = vpop.f32.mrb[0].mxu0
      %v601 = vpop.f32.mrb[0].mxu0
      %v602 = vpop.f32.mrb[0].mxu0
      %603 = vdwg.mxu0
      %v605 = vsel %vm510, %v421, 0
      %v608 = vsel %vm514, %v486, 0
      %610 = vmatprep.subr.bf16.mxu0 0
      %611 = vmatpush1.bf16.msra.mxu0 %v608
      %612 = vmatprep.subr.bf16.mxu0 0
      %613 = vmatpush1.bf16.msra.mxu0 0
      %614 = vmatprep.subr.bf16.mxu0 0
      %615 = vmatpush1.bf16.msra.mxu0 0
      %616 = vmatprep.subr.bf16.mxu0 0
      %617 = vmatpush1.bf16.msra.mxu0 0
      %618 = vmatprep.subr.bf16.mxu0 0
      %619 = vmatpush1.bf16.msra.mxu0 0
      %620 = vmatprep.subr.bf16.mxu0 0
      %621 = vmatpush1.bf16.msra.mxu0 0
      %622 = vmatprep.subr.bf16.mxu0 0
      %623 = vmatpush1.bf16.msra.mxu0 0
      %624 = vmatprep.subr.bf16.mxu0 0
      %625 = vmatpush1.bf16.msra.mxu0 0
      %626 = vmatprep.subr.bf16.mxu0 0
      %627 = vmatpush1.bf16.msra.mxu0 0
      %628 = vmatprep.subr.bf16.mxu0 0
      %629 = vmatpush1.bf16.msra.mxu0 0
      %630 = vmatprep.subr.bf16.mxu0 0
      %631 = vmatpush1.bf16.msra.mxu0 0
      %632 = vmatprep.subr.bf16.mxu0 0
      %633 = vmatpush1.bf16.msra.mxu0 0
      %634 = vmatprep.subr.bf16.mxu0 0
      %635 = vmatpush1.bf16.msra.mxu0 0
      %636 = vmatprep.subr.bf16.mxu0 0
      %637 = vmatpush1.bf16.msra.mxu0 0
      %638 = vmatprep.subr.bf16.mxu0 0
      %639 = vmatpush1.bf16.msra.mxu0 0
      %640 = vmatprep.subr.bf16.mxu0 0
      %641 = vmatpush1.bf16.msra.mxu0 0
      %642 = vmatprep.mubr.bf16.mxu0 0
      %643 = vmatmul.mubr.bf16.gmra.mrb[0].mxu0 %v605
      %v644 = vpop.f32.mrb[0].mxu0
      %v645 = vadd.f32 0.0, %v644
      %v646 = vpop.f32.mrb[0].mxu0
      %v647 = vpop.f32.mrb[0].mxu0
      %v648 = vpop.f32.mrb[0].mxu0
      %649 = vdwg.mxu0
      %v651 = vsel %vm510, %v423, 0
      %v654 = vsel %vm514, %v502, 0
      %656 = vmatprep.subr.bf16.mxu0 0
      %657 = vmatpush1.bf16.msra.mxu0 %v654
      %658 = vmatprep.subr.bf16.mxu0 0
      %659 = vmatpush1.bf16.msra.mxu0 0
      %660 = vmatprep.subr.bf16.mxu0 0
      %661 = vmatpush1.bf16.msra.mxu0 0
      %662 = vmatprep.subr.bf16.mxu0 0
      %663 = vmatpush1.bf16.msra.mxu0 0
      %664 = vmatprep.subr.bf16.mxu0 0
      %665 = vmatpush1.bf16.msra.mxu0 0
      %666 = vmatprep.subr.bf16.mxu0 0
      %667 = vmatpush1.bf16.msra.mxu0 0
      %668 = vmatprep.subr.bf16.mxu0 0
      %669 = vmatpush1.bf16.msra.mxu0 0
      %670 = vmatprep.subr.bf16.mxu0 0
      %671 = vmatpush1.bf16.msra.mxu0 0
      %672 = vmatprep.subr.bf16.mxu0 0
      %673 = vmatpush1.bf16.msra.mxu0 0
      %674 = vmatprep.subr.bf16.mxu0 0
      %675 = vmatpush1.bf16.msra.mxu0 0
      %676 = vmatprep.subr.bf16.mxu0 0
      %677 = vmatpush1.bf16.msra.mxu0 0
      %678 = vmatprep.subr.bf16.mxu0 0
      %679 = vmatpush1.bf16.msra.mxu0 0
      %680 = vmatprep.subr.bf16.mxu0 0
      %681 = vmatpush1.bf16.msra.mxu0 0
      %682 = vmatprep.subr.bf16.mxu0 0
      %683 = vmatpush1.bf16.msra.mxu0 0
      %684 = vmatprep.subr.bf16.mxu0 0
      %685 = vmatpush1.bf16.msra.mxu0 0
      %686 = vmatprep.subr.bf16.mxu0 0
      %687 = vmatpush1.bf16.msra.mxu0 0
      %688 = vmatprep.mubr.bf16.mxu0 0
      %689 = vmatmul.mubr.bf16.gmra.mrb[0].mxu0 %v651
      %v690 = vpop.f32.mrb[0].mxu0
      %v691 = vadd.f32 0.0, %v690
      %v692 = vpop.f32.mrb[0].mxu0
      %v693 = vpop.f32.mrb[0].mxu0
      %v694 = vpop.f32.mrb[0].mxu0
      %695 = vdwg.mxu0
      %v696 = vsel %vm510, %v553, -inf
      %697 = vmax.xlane.f32.xlu0 %v696
      %v698 = vpop.xlane.xlu0 %697
      %v699 = vsel %vm510, %v599, -inf
      %700 = vmax.xlane.f32.xlu0 %v699
      %v701 = vpop.xlane.xlu0 %700
      %v702 = vsel %vm510, %v645, -inf
      %703 = vmax.xlane.f32.xlu0 %v702
      %v704 = vpop.xlane.xlu0 %703
      %v705 = vsel %vm510, %v691, -inf
      %706 = vmax.xlane.f32.xlu0 %v705
      %v707 = vpop.xlane.xlu0 %706
      %v708 = vsub.f32 %v553, %v698
      %v709 = vsub.f32 %v599, %v701
      %v710 = vsub.f32 %v645, %v704
      %v711 = vsub.f32 %v691, %v707
      %v712 = vmul.f32 %v708, 1.442695
      %v713 = vpow.pop %v712
      %v714 = vmul.f32 %v709, 1.442695
      %v715 = vpow.pop %v714
      %v716 = vmul.f32 %v710, 1.442695
      %v717 = vpow.pop %v716
      %v718 = vmul.f32 %v711, 1.442695
      %v719 = vpow.pop %v718
      %v720 = vsel %vm510, %v713, 0.0
      %721 = vadd.xlane.f32.xlu0 %v720
      %v722 = vpop.xlane.xlu0 %721
      %v723 = vsel %vm510, %v715, 0.0
      %724 = vadd.xlane.f32.xlu0 %v723
      %v725 = vpop.xlane.xlu0 %724
      %v726 = vsel %vm510, %v717, 0.0
      %727 = vadd.xlane.f32.xlu0 %v726
      %v728 = vpop.xlane.xlu0 %727
      %v729 = vsel %vm510, %v719, 0.0
      %730 = vadd.xlane.f32.xlu0 %v729
      %v731 = vpop.xlane.xlu0 %730
      %v732 = vrcp.pop %v722
      %v733 = vrcp.pop %v725
      %v734 = vrcp.pop %v728
      %v735 = vrcp.pop %v731
      %v736 = vmul.f32 %v713, %v732
      %v737 = vmul.f32 %v715, %v733
      %v738 = vmul.f32 %v717, %v734
      %v739 = vmul.f32 %v719, %v735
      %v740 = vpack.c.bf16 %v736, %v736
      %v741 = vpack.c.bf16 %v737, %v737
      %v742 = vpack.c.bf16 %v738, %v738
      %v743 = vpack.c.bf16 %v739, %v739
      %744 = vxpose.xlu0.c.b16.start [1/8] %v435, 128
      %745 = vxpose.xlu0.c.b16.cont [2/8] 0, 128
      %746 = vxpose.xlu0.c.b16.cont [3/8] 0, 128
      %747 = vxpose.xlu0.c.b16.cont [4/8] 0, 128
      %748 = vxpose.xlu0.c.b16.cont [5/8] 0, 128
      %749 = vxpose.xlu0.c.b16.cont [6/8] 0, 128
      %750 = vxpose.xlu0.c.b16.cont [7/8] 0, 128
      %751 = vxpose.xlu0.c.b16.end [8/8] 0, 128
      %v752 = vpop.trf.xlu0
      %v753 = vpop.trf.xlu0
      %v754 = vpop.trf.xlu0
      %v755 = vpop.trf.xlu0
      %v756 = vpop.trf.xlu0
      %v757 = vpop.trf.xlu0
      %v758 = vpop.trf.xlu0
      %v759 = vpop.trf.xlu0
      %760 = vxpose.xlu0.c.b16.start [1/8] %v438, 128
      %761 = vxpose.xlu0.c.b16.cont [2/8] 0, 128
      %762 = vxpose.xlu0.c.b16.cont [3/8] 0, 128
      %763 = vxpose.xlu0.c.b16.cont [4/8] 0, 128
      %764 = vxpose.xlu0.c.b16.cont [5/8] 0, 128
      %765 = vxpose.xlu0.c.b16.cont [6/8] 0, 128
      %766 = vxpose.xlu0.c.b16.cont [7/8] 0, 128
      %767 = vxpose.xlu0.c.b16.end [8/8] 0, 128
      %v768 = vpop.trf.xlu0
      %v769 = vpop.trf.xlu0
      %v770 = vpop.trf.xlu0
      %v771 = vpop.trf.xlu0
      %v772 = vpop.trf.xlu0
      %v773 = vpop.trf.xlu0
      %v774 = vpop.trf.xlu0
      %v775 = vpop.trf.xlu0
      %776 = vxpose.xlu0.c.b16.start [1/8] %v441, 128
      %777 = vxpose.xlu0.c.b16.cont [2/8] 0, 128
      %778 = vxpose.xlu0.c.b16.cont [3/8] 0, 128
      %779 = vxpose.xlu0.c.b16.cont [4/8] 0, 128
      %780 = vxpose.xlu0.c.b16.cont [5/8] 0, 128
      %781 = vxpose.xlu0.c.b16.cont [6/8] 0, 128
      %782 = vxpose.xlu0.c.b16.cont [7/8] 0, 128
      %783 = vxpose.xlu0.c.b16.end [8/8] 0, 128
      %v784 = vpop.trf.xlu0
      %v785 = vpop.trf.xlu0
      %v786 = vpop.trf.xlu0
      %v787 = vpop.trf.xlu0
      %v788 = vpop.trf.xlu0
      %v789 = vpop.trf.xlu0
      %v790 = vpop.trf.xlu0
      %v791 = vpop.trf.xlu0
      %792 = vxpose.xlu0.c.b16.start [1/8] %v444, 128
      %793 = vxpose.xlu0.c.b16.cont [2/8] 0, 128
      %794 = vxpose.xlu0.c.b16.cont [3/8] 0, 128
      %795 = vxpose.xlu0.c.b16.cont [4/8] 0, 128
      %796 = vxpose.xlu0.c.b16.cont [5/8] 0, 128
      %797 = vxpose.xlu0.c.b16.cont [6/8] 0, 128
      %798 = vxpose.xlu0.c.b16.cont [7/8] 0, 128
      %799 = vxpose.xlu0.c.b16.end [8/8] 0, 128
      %v800 = vpop.trf.xlu0
      %v801 = vpop.trf.xlu0
      %v802 = vpop.trf.xlu0
      %v803 = vpop.trf.xlu0
      %v804 = vpop.trf.xlu0
      %v805 = vpop.trf.xlu0
      %v806 = vpop.trf.xlu0
      %v807 = vpop.trf.xlu0
      %v809 = vsel %vm510, %v752, 0
      %v812 = vsel %vm510, %v740, 0
      %814 = vmatprep.subr.bf16.mxu0 0
      %815 = vmatpush1.bf16.xpose.msra.mxu0 %v812
      %816 = vmatprep.subr.bf16.mxu0 0
      %817 = vmatpush1.bf16.xpose.msra.mxu0 0
      %818 = vmatprep.subr.bf16.mxu0 0
      %819 = vmatpush1.bf16.xpose.msra.mxu0 0
      %820 = vmatprep.subr.bf16.mxu0 0
      %821 = vmatpush1.bf16.xpose.msra.mxu0 0
      %822 = vmatprep.subr.bf16.mxu0 0
      %823 = vmatpush1.bf16.xpose.msra.mxu0 0
      %824 = vmatprep.subr.bf16.mxu0 0
      %825 = vmatpush1.bf16.xpose.msra.mxu0 0
      %826 = vmatprep.subr.bf16.mxu0 0
      %827 = vmatpush1.bf16.xpose.msra.mxu0 0
      %828 = vmatprep.subr.bf16.mxu0 0
      %829 = vmatpush1.bf16.xpose.msra.mxu0 0
      %830 = vmatprep.subr.bf16.mxu0 0
      %831 = vmatpush1.bf16.xpose.msra.mxu0 0
      %832 = vmatprep.subr.bf16.mxu0 0
      %833 = vmatpush1.bf16.xpose.msra.mxu0 0
      %834 = vmatprep.subr.bf16.mxu0 0
      %835 = vmatpush1.bf16.xpose.msra.mxu0 0
      %836 = vmatprep.subr.bf16.mxu0 0
      %837 = vmatpush1.bf16.xpose.msra.mxu0 0
      %838 = vmatprep.subr.bf16.mxu0 0
      %839 = vmatpush1.bf16.xpose.msra.mxu0 0
      %840 = vmatprep.subr.bf16.mxu0 0
      %841 = vmatpush1.bf16.xpose.msra.mxu0 0
      %842 = vmatprep.subr.bf16.mxu0 0
      %843 = vmatpush1.bf16.xpose.msra.mxu0 0
      %844 = vmatprep.subr.bf16.mxu0 0
      %845 = vmatpush1.bf16.xpose.msra.mxu0 0
      %846 = vmatprep.mubr.bf16.mxu0 0
      %847 = vmatmul.mubr.bf16.gmra.mrb[0].mxu0 %v809
      %v848 = vpop.f32.mrb[0].mxu0
      %v849 = vadd.f32 0.0, %v848
      %v850 = vpop.f32.mrb[0].mxu0
      %v851 = vpop.f32.mrb[0].mxu0
      %v852 = vpop.f32.mrb[0].mxu0
      %853 = vdwg.mxu0
      %v855 = vsel %vm510, %v768, 0
      %v858 = vsel %vm510, %v741, 0
      %860 = vmatprep.subr.bf16.mxu0 0
      %861 = vmatpush1.bf16.xpose.msra.mxu0 %v858
      %862 = vmatprep.subr.bf16.mxu0 0
      %863 = vmatpush1.bf16.xpose.msra.mxu0 0
      %864 = vmatprep.subr.bf16.mxu0 0
      %865 = vmatpush1.bf16.xpose.msra.mxu0 0
      %866 = vmatprep.subr.bf16.mxu0 0
      %867 = vmatpush1.bf16.xpose.msra.mxu0 0
      %868 = vmatprep.subr.bf16.mxu0 0
      %869 = vmatpush1.bf16.xpose.msra.mxu0 0
      %870 = vmatprep.subr.bf16.mxu0 0
      %871 = vmatpush1.bf16.xpose.msra.mxu0 0
      %872 = vmatprep.subr.bf16.mxu0 0
      %873 = vmatpush1.bf16.xpose.msra.mxu0 0
      %874 = vmatprep.subr.bf16.mxu0 0
      %875 = vmatpush1.bf16.xpose.msra.mxu0 0
      %876 = vmatprep.subr.bf16.mxu0 0
      %877 = vmatpush1.bf16.xpose.msra.mxu0 0
      %878 = vmatprep.subr.bf16.mxu0 0
      %879 = vmatpush1.bf16.xpose.msra.mxu0 0
      %880 = vmatprep.subr.bf16.mxu0 0
      %881 = vmatpush1.bf16.xpose.msra.mxu0 0
      %882 = vmatprep.subr.bf16.mxu0 0
      %883 = vmatpush1.bf16.xpose.msra.mxu0 0
      %884 = vmatprep.subr.bf16.mxu0 0
      %885 = vmatpush1.bf16.xpose.msra.mxu0 0
      %886 = vmatprep.subr.bf16.mxu0 0
      %887 = vmatpush1.bf16.xpose.msra.mxu0 0
      %888 = vmatprep.subr.bf16.mxu0 0
      %889 = vmatpush1.bf16.xpose.msra.mxu0 0
      %890 = vmatprep.subr.bf16.mxu0 0
      %891 = vmatpush1.bf16.xpose.msra.mxu0 0
      %892 = vmatprep.mubr.bf16.mxu0 0
      %893 = vmatmul.mubr.bf16.gmra.mrb[0].mxu0 %v855
      %v894 = vpop.f32.mrb[0].mxu0
      %v895 = vadd.f32 0.0, %v894
      %v896 = vpop.f32.mrb[0].mxu0
      %v897 = vpop.f32.mrb[0].mxu0
      %v898 = vpop.f32.mrb[0].mxu0
      %899 = vdwg.mxu0
      %v901 = vsel %vm510, %v784, 0
      %v904 = vsel %vm510, %v742, 0
      %906 = vmatprep.subr.bf16.mxu0 0
      %907 = vmatpush1.bf16.xpose.msra.mxu0 %v904
      %908 = vmatprep.subr.bf16.mxu0 0
      %909 = vmatpush1.bf16.xpose.msra.mxu0 0
      %910 = vmatprep.subr.bf16.mxu0 0
      %911 = vmatpush1.bf16.xpose.msra.mxu0 0
      %912 = vmatprep.subr.bf16.mxu0 0
      %913 = vmatpush1.bf16.xpose.msra.mxu0 0
      %914 = vmatprep.subr.bf16.mxu0 0
      %915 = vmatpush1.bf16.xpose.msra.mxu0 0
      %916 = vmatprep.subr.bf16.mxu0 0
      %917 = vmatpush1.bf16.xpose.msra.mxu0 0
      %918 = vmatprep.subr.bf16.mxu0 0
      %919 = vmatpush1.bf16.xpose.msra.mxu0 0
      %920 = vmatprep.subr.bf16.mxu0 0
      %921 = vmatpush1.bf16.xpose.msra.mxu0 0
      %922 = vmatprep.subr.bf16.mxu0 0
      %923 = vmatpush1.bf16.xpose.msra.mxu0 0
      %924 = vmatprep.subr.bf16.mxu0 0
      %925 = vmatpush1.bf16.xpose.msra.mxu0 0
      %926 = vmatprep.subr.bf16.mxu0 0
      %927 = vmatpush1.bf16.xpose.msra.mxu0 0
      %928 = vmatprep.subr.bf16.mxu0 0
      %929 = vmatpush1.bf16.xpose.msra.mxu0 0
      %930 = vmatprep.subr.bf16.mxu0 0
      %931 = vmatpush1.bf16.xpose.msra.mxu0 0
      %932 = vmatprep.subr.bf16.mxu0 0
      %933 = vmatpush1.bf16.xpose.msra.mxu0 0
      %934 = vmatprep.subr.bf16.mxu0 0
      %935 = vmatpush1.bf16.xpose.msra.mxu0 0
      %936 = vmatprep.subr.bf16.mxu0 0
      %937 = vmatpush1.bf16.xpose.msra.mxu0 0
      %938 = vmatprep.mubr.bf16.mxu0 0
      %939 = vmatmul.mubr.bf16.gmra.mrb[0].mxu0 %v901
      %v940 = vpop.f32.mrb[0].mxu0
      %v941 = vadd.f32 0.0, %v940
      %v942 = vpop.f32.mrb[0].mxu0
      %v943 = vpop.f32.mrb[0].mxu0
      %v944 = vpop.f32.mrb[0].mxu0
      %945 = vdwg.mxu0
      %v947 = vsel %vm510, %v800, 0
      %v950 = vsel %vm510, %v743, 0
      %952 = vmatprep.subr.bf16.mxu0 0
      %953 = vmatpush1.bf16.xpose.msra.mxu0 %v950
      %954 = vmatprep.subr.bf16.mxu0 0
      %955 = vmatpush1.bf16.xpose.msra.mxu0 0
      %956 = vmatprep.subr.bf16.mxu0 0
      %957 = vmatpush1.bf16.xpose.msra.mxu0 0
      %958 = vmatprep.subr.bf16.mxu0 0
      %959 = vmatpush1.bf16.xpose.msra.mxu0 0
      %960 = vmatprep.subr.bf16.mxu0 0
      %961 = vmatpush1.bf16.xpose.msra.mxu0 0
      %962 = vmatprep.subr.bf16.mxu0 0
      %963 = vmatpush1.bf16.xpose.msra.mxu0 0
      %964 = vmatprep.subr.bf16.mxu0 0
      %965 = vmatpush1.bf16.xpose.msra.mxu0 0
      %966 = vmatprep.subr.bf16.mxu0 0
      %967 = vmatpush1.bf16.xpose.msra.mxu0 0
      %968 = vmatprep.subr.bf16.mxu0 0
      %969 = vmatpush1.bf16.xpose.msra.mxu0 0
      %970 = vmatprep.subr.bf16.mxu0 0
      %971 = vmatpush1.bf16.xpose.msra.mxu0 0
      %972 = vmatprep.subr.bf16.mxu0 0
      %973 = vmatpush1.bf16.xpose.msra.mxu0 0
      %974 = vmatprep.subr.bf16.mxu0 0
      %975 = vmatpush1.bf16.xpose.msra.mxu0 0
      %976 = vmatprep.subr.bf16.mxu0 0
      %977 = vmatpush1.bf16.xpose.msra.mxu0 0
      %978 = vmatprep.subr.bf16.mxu0 0
      %979 = vmatpush1.bf16.xpose.msra.mxu0 0
      %980 = vmatprep.subr.bf16.mxu0 0
      %981 = vmatpush1.bf16.xpose.msra.mxu0 0
      %982 = vmatprep.subr.bf16.mxu0 0
      %983 = vmatpush1.bf16.xpose.msra.mxu0 0
      %984 = vmatprep.mubr.bf16.mxu0 0
      %985 = vmatmul.mubr.bf16.gmra.mrb[0].mxu0 %v947
      %v986 = vpop.f32.mrb[0].mxu0
      %v987 = vadd.f32 0.0, %v986
      %v988 = vpop.f32.mrb[0].mxu0
      %v989 = vpop.f32.mrb[0].mxu0
      %v990 = vpop.f32.mrb[0].mxu0
      %991 = vdwg.mxu0
      %992 = vxpose.xlu0.b32.start [1/16] %v849, 128
      %993 = vxpose.xlu0.b32.cont [2/16] 0.0, 128
      %994 = vxpose.xlu0.b32.cont [3/16] 0.0, 128
      %995 = vxpose.xlu0.b32.cont [4/16] 0.0, 128
      %996 = vxpose.xlu0.b32.cont [5/16] 0.0, 128
      %997 = vxpose.xlu0.b32.cont [6/16] 0.0, 128
      %998 = vxpose.xlu0.b32.cont [7/16] 0.0, 128
      %999 = vxpose.xlu0.b32.cont [8/16] 0.0, 128
      %1000 = vxpose.xlu0.b32.cont [9/16] 0.0, 128
      %1001 = vxpose.xlu0.b32.cont [10/16] 0.0, 128
      %1002 = vxpose.xlu0.b32.cont [11/16] 0.0, 128
      %1003 = vxpose.xlu0.b32.cont [12/16] 0.0, 128
      %1004 = vxpose.xlu0.b32.cont [13/16] 0.0, 128
      %1005 = vxpose.xlu0.b32.cont [14/16] 0.0, 128
      %1006 = vxpose.xlu0.b32.cont [15/16] 0.0, 128
      %1007 = vxpose.xlu0.b32.end [16/16] 0.0, 128
      %v1008 = vpop.trf.xlu0
      %v1009 = vpop.trf.xlu0
      %v1010 = vpop.trf.xlu0
      %v1011 = vpop.trf.xlu0
      %v1012 = vpop.trf.xlu0
      %v1013 = vpop.trf.xlu0
      %v1014 = vpop.trf.xlu0
      %v1015 = vpop.trf.xlu0
      %v1016 = vpop.trf.xlu0
      %v1017 = vpop.trf.xlu0
      %v1018 = vpop.trf.xlu0
      %v1019 = vpop.trf.xlu0
      %v1020 = vpop.trf.xlu0
      %v1021 = vpop.trf.xlu0
      %v1022 = vpop.trf.xlu0
      %v1023 = vpop.trf.xlu0
      %1024 = vxpose.xlu0.b32.start [1/16] %v895, 128
      %1025 = vxpose.xlu0.b32.cont [2/16] 0.0, 128
      %1026 = vxpose.xlu0.b32.cont [3/16] 0.0, 128
      %1027 = vxpose.xlu0.b32.cont [4/16] 0.0, 128
      %1028 = vxpose.xlu0.b32.cont [5/16] 0.0, 128
      %1029 = vxpose.xlu0.b32.cont [6/16] 0.0, 128
      %1030 = vxpose.xlu0.b32.cont [7/16] 0.0, 128
      %1031 = vxpose.xlu0.b32.cont [8/16] 0.0, 128
      %1032 = vxpose.xlu0.b32.cont [9/16] 0.0, 128
      %1033 = vxpose.xlu0.b32.cont [10/16] 0.0, 128
      %1034 = vxpose.xlu0.b32.cont [11/16] 0.0, 128
      %1035 = vxpose.xlu0.b32.cont [12/16] 0.0, 128
      %1036 = vxpose.xlu0.b32.cont [13/16] 0.0, 128
      %1037 = vxpose.xlu0.b32.cont [14/16] 0.0, 128
      %1038 = vxpose.xlu0.b32.cont [15/16] 0.0, 128
      %1039 = vxpose.xlu0.b32.end [16/16] 0.0, 128
      %v1040 = vpop.trf.xlu0
      %v1041 = vpop.trf.xlu0
      %v1042 = vpop.trf.xlu0
      %v1043 = vpop.trf.xlu0
      %v1044 = vpop.trf.xlu0
      %v1045 = vpop.trf.xlu0
      %v1046 = vpop.trf.xlu0
      %v1047 = vpop.trf.xlu0
      %v1048 = vpop.trf.xlu0
      %v1049 = vpop.trf.xlu0
      %v1050 = vpop.trf.xlu0
      %v1051 = vpop.trf.xlu0
      %v1052 = vpop.trf.xlu0
      %v1053 = vpop.trf.xlu0
      %v1054 = vpop.trf.xlu0
      %v1055 = vpop.trf.xlu0
      %1056 = vxpose.xlu0.b32.start [1/16] %v941, 128
      %1057 = vxpose.xlu0.b32.cont [2/16] 0.0, 128
      %1058 = vxpose.xlu0.b32.cont [3/16] 0.0, 128
      %1059 = vxpose.xlu0.b32.cont [4/16] 0.0, 128
      %1060 = vxpose.xlu0.b32.cont [5/16] 0.0, 128
      %1061 = vxpose.xlu0.b32.cont [6/16] 0.0, 128
      %1062 = vxpose.xlu0.b32.cont [7/16] 0.0, 128
      %1063 = vxpose.xlu0.b32.cont [8/16] 0.0, 128
      %1064 = vxpose.xlu0.b32.cont [9/16] 0.0, 128
      %1065 = vxpose.xlu0.b32.cont [10/16] 0.0, 128
      %1066 = vxpose.xlu0.b32.cont [11/16] 0.0, 128
      %1067 = vxpose.xlu0.b32.cont [12/16] 0.0, 128
      %1068 = vxpose.xlu0.b32.cont [13/16] 0.0, 128
      %1069 = vxpose.xlu0.b32.cont [14/16] 0.0, 128
      %1070 = vxpose.xlu0.b32.cont [15/16] 0.0, 128
      %1071 = vxpose.xlu0.b32.end [16/16] 0.0, 128
      %v1072 = vpop.trf.xlu0
      %v1073 = vpop.trf.xlu0
      %v1074 = vpop.trf.xlu0
      %v1075 = vpop.trf.xlu0
      %v1076 = vpop.trf.xlu0
      %v1077 = vpop.trf.xlu0
      %v1078 = vpop.trf.xlu0
      %v1079 = vpop.trf.xlu0
      %v1080 = vpop.trf.xlu0
      %v1081 = vpop.trf.xlu0
      %v1082 = vpop.trf.xlu0
      %v1083 = vpop.trf.xlu0
      %v1084 = vpop.trf.xlu0
      %v1085 = vpop.trf.xlu0
      %v1086 = vpop.trf.xlu0
      %v1087 = vpop.trf.xlu0
      %1088 = vxpose.xlu0.b32.start [1/16] %v987, 128
      %1089 = vxpose.xlu0.b32.cont [2/16] 0.0, 128
      %1090 = vxpose.xlu0.b32.cont [3/16] 0.0, 128
      %1091 = vxpose.xlu0.b32.cont [4/16] 0.0, 128
      %1092 = vxpose.xlu0.b32.cont [5/16] 0.0, 128
      %1093 = vxpose.xlu0.b32.cont [6/16] 0.0, 128
      %1094 = vxpose.xlu0.b32.cont [7/16] 0.0, 128
      %1095 = vxpose.xlu0.b32.cont [8/16] 0.0, 128
      %1096 = vxpose.xlu0.b32.cont [9/16] 0.0, 128
      %1097 = vxpose.xlu0.b32.cont [10/16] 0.0, 128
      %1098 = vxpose.xlu0.b32.cont [11/16] 0.0, 128
      %1099 = vxpose.xlu0.b32.cont [12/16] 0.0, 128
      %1100 = vxpose.xlu0.b32.cont [13/16] 0.0, 128
      %1101 = vxpose.xlu0.b32.cont [14/16] 0.0, 128
      %1102 = vxpose.xlu0.b32.cont [15/16] 0.0, 128
      %1103 = vxpose.xlu0.b32.end [16/16] 0.0, 128
      %v1104 = vpop.trf.xlu0
      %v1105 = vpop.trf.xlu0
      %v1106 = vpop.trf.xlu0
      %v1107 = vpop.trf.xlu0
      %v1108 = vpop.trf.xlu0
      %v1109 = vpop.trf.xlu0
      %v1110 = vpop.trf.xlu0
      %v1111 = vpop.trf.xlu0
      %v1112 = vpop.trf.xlu0
      %v1113 = vpop.trf.xlu0
      %v1114 = vpop.trf.xlu0
      %v1115 = vpop.trf.xlu0
      %v1116 = vpop.trf.xlu0
      %v1117 = vpop.trf.xlu0
      %v1118 = vpop.trf.xlu0
      %v1119 = vpop.trf.xlu0
      %v1120 = vcombine.low %v1008, %v1072
      %v1121 = vcombine.high %v1008, %v1072
      %v1123 = vunpack.c.l.s4 1983009808
      %v1124 = vunpack.c.0.s8 %v1123
      %v1125 = vlaneseq
      %v1126 = vshrl.u32 %v1125, 7
      %v1127 = vsub.s32 %v1124, %v1126
      %v1128 = vrot.slane %v1120, %v1127
      %v1130 = vunpack.c.l.s4 1983009808
      %v1131 = vunpack.c.0.s8 %v1130
      %v1132 = vlaneseq
      %v1133 = vshrl.u32 %v1132, 7
      %v1134 = vsub.s32 %v1131, %v1133
      %v1135 = vrot.slane %v1121, %v1134
      %v1136 = vcombine.low %v1040, %v1104
      %v1137 = vcombine.high %v1040, %v1104
      %v1139 = vunpack.c.l.s4 1983009808
      %v1140 = vunpack.c.0.s8 %v1139
      %v1141 = vlaneseq
      %v1142 = vshrl.u32 %v1141, 7
      %v1143 = vsub.s32 %v1140, %v1142
      %v1144 = vrot.slane %v1136, %v1143
      %v1146 = vunpack.c.l.s4 1983009808
      %v1147 = vunpack.c.0.s8 %v1146
      %v1148 = vlaneseq
      %v1149 = vshrl.u32 %v1148, 7
      %v1150 = vsub.s32 %v1147, %v1149
      %v1151 = vrot.slane %v1137, %v1150
      %v1152 = vcombine.low %v1128, %v1144
      %v1153 = vcombine.high %v1128, %v1144
      %v1155 = vunpack.c.l.s4 1934713408
      %v1156 = vunpack.c.0.s8 %v1155
      %v1157 = vlaneseq
      %v1158 = vshrl.u32 %v1157, 7
      %v1159 = vsub.s32 %v1156, %v1158
      %v1160 = vrot.slane %v1152, %v1159
      %v1162 = vunpack.c.l.s4 1934713408
      %v1163 = vunpack.c.0.s8 %v1162
      %v1164 = vlaneseq
      %v1165 = vshrl.u32 %v1164, 7
      %v1166 = vsub.s32 %v1163, %v1165
      %v1167 = vrot.slane %v1153, %v1166
      %v1168 = vcombine.low %v1135, %v1151
      %v1169 = vcombine.high %v1135, %v1151
      %v1171 = vunpack.c.l.s4 1934713408
      %v1172 = vunpack.c.0.s8 %v1171
      %v1173 = vlaneseq
      %v1174 = vshrl.u32 %v1173, 7
      %v1175 = vsub.s32 %v1172, %v1174
      %v1176 = vrot.slane %v1168, %v1175
      %v1178 = vunpack.c.l.s4 1934713408
      %v1179 = vunpack.c.0.s8 %v1178
      %v1180 = vlaneseq
      %v1181 = vshrl.u32 %v1180, 7
      %v1182 = vsub.s32 %v1179, %v1181
      %v1183 = vrot.slane %v1169, %v1182
      %v1184 = vcombine.high %v1160, 0.0
      %v1185 = vcombine.high %v1167, 0.0
      %v1186 = vcombine.high %v1176, 0.0
      %v1187 = vcombine.high %v1183, 0.0
      %v1188 = vcombine.low %v1160, %v1167
      %v1190 = vunpack.c.l.s4 1983009808
      %v1191 = vunpack.c.0.s8 %v1190
      %v1192 = vlaneseq
      %v1193 = vshrl.u32 %v1192, 7
      %v1194 = vsub.s32 %v1191, %v1193
      %v1195 = vrot.slane %v1188, %v1194
      %v1196 = vcombine.low %v1184, %v1185
      %v1198 = vunpack.c.l.s4 1983009808
      %v1199 = vunpack.c.0.s8 %v1198
      %v1200 = vlaneseq
      %v1201 = vshrl.u32 %v1200, 7
      %v1202 = vsub.s32 %v1199, %v1201
      %v1203 = vrot.slane %v1196, %v1202
      %v1204 = vcombine.low %v1176, %v1183
      %v1206 = vunpack.c.l.s4 1983009808
      %v1207 = vunpack.c.0.s8 %v1206
      %v1208 = vlaneseq
      %v1209 = vshrl.u32 %v1208, 7
      %v1210 = vsub.s32 %v1207, %v1209
      %v1211 = vrot.slane %v1204, %v1210
      %v1212 = vcombine.low %v1186, %v1187
      %v1214 = vunpack.c.l.s4 1983009808
      %v1215 = vunpack.c.0.s8 %v1214
      %v1216 = vlaneseq
      %v1217 = vshrl.u32 %v1216, 7
      %v1218 = vsub.s32 %v1215, %v1217
      %v1219 = vrot.slane %v1212, %v1218
      %v1220 = vcombine.low %v1195, %v1203
      %v1221 = vcombine.high %v1195, %v1203
      %v1223 = vunpack.c.l.s4 1934713408
      %v1224 = vunpack.c.0.s8 %v1223
      %v1225 = vlaneseq
      %v1226 = vshrl.u32 %v1225, 7
      %v1227 = vsub.s32 %v1224, %v1226
      %v1228 = vrot.slane %v1220, %v1227
      %v1230 = vunpack.c.l.s4 1934713408
      %v1231 = vunpack.c.0.s8 %v1230
      %v1232 = vlaneseq
      %v1233 = vshrl.u32 %v1232, 7
      %v1234 = vsub.s32 %v1231, %v1233
      %v1235 = vrot.slane %v1221, %v1234
      %v1236 = vcombine.low %v1211, %v1219
      %v1237 = vcombine.high %v1211, %v1219
      %v1239 = vunpack.c.l.s4 1934713408
      %v1240 = vunpack.c.0.s8 %v1239
      %v1241 = vlaneseq
      %v1242 = vshrl.u32 %v1241, 7
      %v1243 = vsub.s32 %v1240, %v1242
      %v1244 = vrot.slane %v1236, %v1243
      %v1246 = vunpack.c.l.s4 1934713408
      %v1247 = vunpack.c.0.s8 %v1246
      %v1248 = vlaneseq
      %v1249 = vshrl.u32 %v1248, 7
      %v1250 = vsub.s32 %v1247, %v1249
      %v1251 = vrot.slane %v1237, %v1250
      %v1252 = vcombine.low %v1228, %v1244
      %v1253 = vcombine.high %v1228, %v1244
      %v1254 = vcombine.low %v1235, %v1251
      %v1255 = vcombine.high %v1235, %v1251
      %1257 = vrot.lane.b32.xlu0 %v1253, 8
      %v1258 = vpop.permute.xlu0 %1257
      %1261 = vrot.lane.b32.xlu0 %v1254, 16
      %v1262 = vpop.permute.xlu0 %1261
      %1265 = vrot.lane.b32.xlu0 %v1255, 24
      %v1266 = vpop.permute.xlu0 %1265
      %v1268 = vsel %vm510, %v1252, %v1258
      %vm1269 = vcmask 130048
      %v1270 = vsel %vm1269, %v1268, %v1262
      %vm1271 = vcmask 195584
      %v1272 = vsel %vm1271, %v1270, %v1266
      %v1273 = vpack.c.bf16 %v1272, %v1272
      %v1274 = vld [vmem:[%s7] sm:$0x1]
      %v1275 = vld [vmem:[%s7 + $0x1] sm:$0x1]
      %v1276 = vld [vmem:[%s7 + $0x2] sm:$0x1]
      %v1277 = vld [vmem:[%s7 + $0x3] sm:$0x1]
      %v1278 = vld [vmem:[%s7 + $0x4] sm:$0x1]
      %v1279 = vld [vmem:[%s7 + $0x5] sm:$0x1]
      %v1280 = vld [vmem:[%s3] sm:$0xf]
      %v1281 = vld [vmem:[%s3 + $0x4] sm:$0xf]
      %v1282 = vld [vmem:[%s3 + $0x8] sm:$0xf]
      %v1283 = vld [vmem:[%s3 + $0xc] sm:$0xf]
      %v1284 = vlaneseq
      %v1285 = vshrl.u32 %v1284, 7
      %v1286 = vsub.s32 0, %v1285
      %v1287 = vrot.slane %v1274, %v1286
      %v1292 = vunpack.c.l.b16 %v1280
      %v1293 = vunpack.c.l.b16 %v1281
      %v1294 = vunpack.c.l.b16 %v1282
      %v1295 = vunpack.c.l.b16 %v1283
      %v1296 = vpack.c.b16 %v1293, %v1292
      %v1297 = vpack.c.b16 %v1295, %v1294
      %vm1300 = vcmask 261120
      %v1302 = vsel %vm1300, %v1273, 0
      %1304 = vmatprep.subr.bf16.mxu0 0
      %1305 = vmatpush1.bf16.msra.mxu0 %v1296
      %1306 = vmatprep.subr.bf16.mxu0 0
      %1307 = vmatpush1.bf16.msra.mxu0 %v1297
      %1308 = vmatprep.subr.bf16.mxu0 0
      %1309 = vmatpush1.bf16.msra.mxu0 0
      %1310 = vmatprep.subr.bf16.mxu0 0
      %1311 = vmatpush1.bf16.msra.mxu0 0
      %1312 = vmatprep.subr.bf16.mxu0 0
      %1313 = vmatpush1.bf16.msra.mxu0 0
      %1314 = vmatprep.subr.bf16.mxu0 0
      %1315 = vmatpush1.bf16.msra.mxu0 0
      %1316 = vmatprep.subr.bf16.mxu0 0
      %1317 = vmatpush1.bf16.msra.mxu0 0
      %1318 = vmatprep.subr.bf16.mxu0 0
      %1319 = vmatpush1.bf16.msra.mxu0 0
      %1320 = vmatprep.subr.bf16.mxu0 0
      %1321 = vmatpush1.bf16.msra.mxu0 0
      %1322 = vmatprep.subr.bf16.mxu0 0
      %1323 = vmatpush1.bf16.msra.mxu0 0
      %1324 = vmatprep.subr.bf16.mxu0 0
      %1325 = vmatpush1.bf16.msra.mxu0 0
      %1326 = vmatprep.subr.bf16.mxu0 0
      %1327 = vmatpush1.bf16.msra.mxu0 0
      %1328 = vmatprep.subr.bf16.mxu0 0
      %1329 = vmatpush1.bf16.msra.mxu0 0
      %1330 = vmatprep.subr.bf16.mxu0 0
      %1331 = vmatpush1.bf16.msra.mxu0 0
      %1332 = vmatprep.subr.bf16.mxu0 0
      %1333 = vmatpush1.bf16.msra.mxu0 0
      %1334 = vmatprep.subr.bf16.mxu0 0
      %1335 = vmatpush1.bf16.msra.mxu0 0
      %1336 = vmatprep.mubr.bf16.mxu0 0
      %1337 = vmatmul.mubr.bf16.gmra.mrb[0].mxu0 %v1302
      %v1338 = vpop.f32.mrb[0].mxu0
      %v1339 = vadd.f32 %v1287, %v1338
      %v1340 = vpop.f32.mrb[0].mxu0
      %v1341 = vpop.f32.mrb[0].mxu0
      %v1342 = vpop.f32.mrb[0].mxu0
      %1343 = vdwg.mxu0
      %v1344 = vunpack.c.l.bf16 %v413
      %v1345 = vadd.f32 %v1344, %v1339
      %v1346 = vsel %vm1300, %v1345, 0.0
      %1347 = vadd.xlane.f32.xlu0 %v1346
      %v1348 = vpop.xlane.xlu0 %1347
      %v1349 = vrcp.pop 32.0
      %v1350 = vmul.f32 %v1348, %v1349
      %v1351 = vsub.f32 %v1345, %v1350
      %v1352 = vmul.f32 %v1351, %v1351
      %v1353 = vsel %vm1300, %v1352, 0.0
      %1354 = vadd.xlane.f32.xlu0 %v1353
      %v1355 = vpop.xlane.xlu0 %1354
      %v1356 = vmul.f32 %v1355, %v1349
      %v1357 = vadd.f32 %v1356, 1e-06
      %v1358 = vrsqrt.pop %v1357
      %v1359 = vmul.f32 %v1351, %v1358
      %v1360 = vlaneseq
      %v1361 = vshrl.u32 %v1360, 7
      %v1362 = vsub.s32 0, %v1361
      %v1363 = vrot.slane %v1276, %v1362
      %v1364 = vmul.f32 %v1359, %v1363
      %v1365 = vlaneseq
      %v1366 = vshrl.u32 %v1365, 7
      %v1367 = vsub.s32 0, %v1366
      %v1368 = vrot.slane %v1277, %v1367
      %v1369 = vadd.f32 %v1364, %v1368
      %v1370 = vpack.c.bf16 %v1369, %v1369
      %v1371 = vld [vmem:[%s4] sm:$0xf]
      %v1372 = vld [vmem:[%s4 + $0x4] sm:$0xf]
      %v1373 = vld [vmem:[%s4 + $0x8] sm:$0xf]
      %v1374 = vld [vmem:[%s4 + $0xc] sm:$0xf]
      %v1375 = vld [vmem:[%s5] sm:$0x1]
      %v1377 = vlaneseq
      %v1378 = vshrl.u32 %v1377, 7
      %v1379 = vsub.s32 0, %v1378
      %v1380 = vrot.slane %v1375, %v1379
      %v1386 = vunpack.c.l.b16 %v1371
      %v1387 = vunpack.c.l.b16 %v1372
      %v1388 = vunpack.c.l.b16 %v1373
      %v1389 = vunpack.c.l.b16 %v1374
      %v1390 = vpack.c.b16 %v1387, %v1386
      %v1391 = vpack.c.b16 %v1389, %v1388
      %v1395 = vsel %vm1300, %v1370, 0
      %1397 = vmatprep.subr.bf16.mxu0 0
      %1398 = vmatpush1.bf16.msra.mxu0 %v1390
      %1399 = vmatprep.subr.bf16.mxu0 0
      %1400 = vmatpush1.bf16.msra.mxu0 %v1391
      %1401 = vmatprep.subr.bf16.mxu0 0
      %1402 = vmatpush1.bf16.msra.mxu0 0
      %1403 = vmatprep.subr.bf16.mxu0 0
      %1404 = vmatpush1.bf16.msra.mxu0 0
      %1405 = vmatprep.subr.bf16.mxu0 0
      %1406 = vmatpush1.bf16.msra.mxu0 0
      %1407 = vmatprep.subr.bf16.mxu0 0
      %1408 = vmatpush1.bf16.msra.mxu0 0
      %1409 = vmatprep.subr.bf16.mxu0 0
      %1410 = vmatpush1.bf16.msra.mxu0 0
      %1411 = vmatprep.subr.bf16.mxu0 0
      %1412 = vmatpush1.bf16.msra.mxu0 0
      %1413 = vmatprep.subr.bf16.mxu0 0
      %1414 = vmatpush1.bf16.msra.mxu0 0
      %1415 = vmatprep.subr.bf16.mxu0 0
      %1416 = vmatpush1.bf16.msra.mxu0 0
      %1417 = vmatprep.subr.bf16.mxu0 0
      %1418 = vmatpush1.bf16.msra.mxu0 0
      %1419 = vmatprep.subr.bf16.mxu0 0
      %1420 = vmatpush1.bf16.msra.mxu0 0
      %1421 = vmatprep.subr.bf16.mxu0 0
      %1422 = vmatpush1.bf16.msra.mxu0 0
      %1423 = vmatprep.subr.bf16.mxu0 0
      %1424 = vmatpush1.bf16.msra.mxu0 0
      %1425 = vmatprep.subr.bf16.mxu0 0
      %1426 = vmatpush1.bf16.msra.mxu0 0
      %1427 = vmatprep.subr.bf16.mxu0 0
      %1428 = vmatpush1.bf16.msra.mxu0 0
      %1429 = vmatprep.mubr.bf16.mxu0 0
      %1430 = vmatmul.mubr.bf16.gmra.mrb[0].mxu0 %v1395
      %v1431 = vpop.f32.mrb[0].mxu0
      %v1432 = vadd.f32 %v1380, %v1431
      %v1433 = vpop.f32.mrb[0].mxu0
      %v1434 = vpop.f32.mrb[0].mxu0
      %v1435 = vpop.f32.mrb[0].mxu0
      %1436 = vdwg.mxu0
      %v1437 = vmax.f32 %v1432, 0.0
      %v1438 = vpack.c.bf16 %v1437, %v1437
      %v1439 = vld [vmem:[%s6] sm:$0xf]
      %v1440 = vld [vmem:[%s6 + $0x4] sm:$0xf]
      %v1441 = vld [vmem:[%s6 + $0x8] sm:$0xf]
      %v1442 = vld [vmem:[%s6 + $0xc] sm:$0xf]
      %v1443 = vld [vmem:[%s6 + $0x10] sm:$0xf]
      %v1444 = vld [vmem:[%s6 + $0x14] sm:$0xf]
      %v1445 = vld [vmem:[%s6 + $0x18] sm:$0xf]
      %v1446 = vld [vmem:[%s6 + $0x1c] sm:$0xf]
      %v1447 = vlaneseq
      %v1448 = vshrl.u32 %v1447, 7
      %v1449 = vsub.s32 0, %v1448
      %v1450 = vrot.slane %v1275, %v1449
      %v1459 = vunpack.c.l.b16 %v1439
      %v1460 = vunpack.c.l.b16 %v1440
      %v1461 = vunpack.c.l.b16 %v1441
      %v1462 = vunpack.c.l.b16 %v1442
      %v1463 = vunpack.c.l.b16 %v1443
      %v1464 = vunpack.c.l.b16 %v1444
      %v1465 = vunpack.c.l.b16 %v1445
      %v1466 = vunpack.c.l.b16 %v1446
      %v1467 = vpack.c.b16 %v1460, %v1459
      %v1468 = vpack.c.b16 %v1462, %v1461
      %v1469 = vpack.c.b16 %v1464, %v1463
      %v1470 = vpack.c.b16 %v1466, %v1465
      %vm1475 = vcmask 523264
      %v1477 = vsel %vm1475, %v1438, 0
      %1479 = vmatprep.subr.bf16.mxu0 0
      %1480 = vmatpush1.bf16.msra.mxu0 %v1467
      %1481 = vmatprep.subr.bf16.mxu0 0
      %1482 = vmatpush1.bf16.msra.mxu0 %v1468
      %1483 = vmatprep.subr.bf16.mxu0 0
      %1484 = vmatpush1.bf16.msra.mxu0 %v1469
      %1485 = vmatprep.subr.bf16.mxu0 0
      %1486 = vmatpush1.bf16.msra.mxu0 %v1470
      %1487 = vmatprep.subr.bf16.mxu0 0
      %1488 = vmatpush1.bf16.msra.mxu0 0
      %1489 = vmatprep.subr.bf16.mxu0 0
      %1490 = vmatpush1.bf16.msra.mxu0 0
      %1491 = vmatprep.subr.bf16.mxu0 0
      %1492 = vmatpush1.bf16.msra.mxu0 0
      %1493 = vmatprep.subr.bf16.mxu0 0
      %1494 = vmatpush1.bf16.msra.mxu0 0
      %1495 = vmatprep.subr.bf16.mxu0 0
      %1496 = vmatpush1.bf16.msra.mxu0 0
      %1497 = vmatprep.subr.bf16.mxu0 0
      %1498 = vmatpush1.bf16.msra.mxu0 0
      %1499 = vmatprep.subr.bf16.mxu0 0
      %1500 = vmatpush1.bf16.msra.mxu0 0
      %1501 = vmatprep.subr.bf16.mxu0 0
      %1502 = vmatpush1.bf16.msra.mxu0 0
      %1503 = vmatprep.subr.bf16.mxu0 0
      %1504 = vmatpush1.bf16.msra.mxu0 0
      %1505 = vmatprep.subr.bf16.mxu0 0
      %1506 = vmatpush1.bf16.msra.mxu0 0
      %1507 = vmatprep.subr.bf16.mxu0 0
      %1508 = vmatpush1.bf16.msra.mxu0 0
      %1509 = vmatprep.subr.bf16.mxu0 0
      %1510 = vmatpush1.bf16.msra.mxu0 0
      %1511 = vmatprep.mubr.bf16.mxu0 0
      %1512 = vmatmul.mubr.bf16.gmra.mrb[0].mxu0 %v1477
      %v1513 = vpop.f32.mrb[0].mxu0
      %v1514 = vadd.f32 %v1450, %v1513
      %v1515 = vpop.f32.mrb[0].mxu0
      %v1516 = vpop.f32.mrb[0].mxu0
      %v1517 = vpop.f32.mrb[0].mxu0
      %1518 = vdwg.mxu0
      %v1519 = vadd.f32 %v1369, %v1514
      %v1520 = vsel %vm1300, %v1519, 0.0
      %1521 = vadd.xlane.f32.xlu0 %v1520
      %v1522 = vpop.xlane.xlu0 %1521
      %v1523 = vmul.f32 %v1522, %v1349
      %v1524 = vsub.f32 %v1519, %v1523
      %v1525 = vmul.f32 %v1524, %v1524
      %v1526 = vsel %vm1300, %v1525, 0.0
      %1527 = vadd.xlane.f32.xlu0 %v1526
      %v1528 = vpop.xlane.xlu0 %1527
      %v1529 = vmul.f32 %v1528, %v1349
      %v1530 = vadd.f32 %v1529, 1e-06
      %v1531 = vrsqrt.pop %v1530
      %v1532 = vmul.f32 %v1524, %v1531
      %v1533 = vlaneseq
      %v1534 = vshrl.u32 %v1533, 7
      %v1535 = vsub.s32 0, %v1534
      %v1536 = vrot.slane %v1278, %v1535
      %v1537 = vmul.f32 %v1532, %v1536
      %v1538 = vlaneseq
      %v1539 = vshrl.u32 %v1538, 7
      %v1540 = vsub.s32 0, %v1539
      %v1541 = vrot.slane %v1279, %v1540
      %v1542 = vadd.f32 %v1537, %v1541
      %v1543 = vpack.c.bf16 %v1542, %v1542
      %vm1544 = vcmask 257024
      %1545 = vst.msk [vmem:[%s320] sm:$0xf] %vm1544, %v1543
      %p1546 = scmp.lt.s32.totalorder %s23, 1
      %s1547 = scalar_select %p1546, %s23, 1
      %p1548 = scmp.lt.s32.totalorder %s24, 0
      %s1549 = scalar_select %p1548, %s24, 0
      %s1550 = sadd.s32 %s1549, %s1547
      %s1551 = smul.addr %s1550, 4
      %s1552 = scalar_lea.vmem %s8, %s1551
      // Predicated region
      $region57: #{closed_call.4} parent=51 // pred_check
        %p1553 = pneg %p224
      $region58: #{closed_call.4} parent=51 // pred_check_branch
        %1555 = sbr.rel (%p1553) target = $region60
      $region59: #{closed_call.4} parent=51 // pred_region
        _
      $region60: #{closed_call.4} parent=51 // pred_fallthru
        _
    $region52: #{closed_call.4} parent=5 // pred_fallthru
      _
    %p1556 = scmp.le.s32.totalorder 2, %s14
    // Predicated region
    $region61: #{closed_call.4} parent=5 // pred_check
      %p1557 = pneg %p1556
    $region62: #{closed_call.4} parent=5 // pred_check_branch
      %1559 = sbr.rel (%p1557) target = $region64
    $region63: #{closed_call.4} parent=5 // pred_region
      %s1560 = ssub.s32 %s14, 2
      // Predicated region
      $region65: #{closed_call.4} parent=63 // pred_check
        %p1561 = pneg %p230
      $region66: #{closed_call.4} parent=63 // pred_check_branch
        %1563 = sbr.rel (%p1561) target = $region68
      $region67: #{closed_call.4} parent=63 // pred_region
        %p1564 = scmp.lt.s32.totalorder %s25, 1
        %s1565 = scalar_select %p1564, %s25, 1
        %p1566 = scmp.lt.s32.totalorder %s26, 0
        %s1567 = scalar_select %p1566, %s26, 0
        %s1568 = sadd.s32 %s1567, %s1565
        %s1569 = smul.addr %s1568, 4
        %s1570 = scalar_lea.vmem %s8, %s1569
      $region68: #{closed_call.4} parent=63 // pred_fallthru
        _
    $region64: #{closed_call.4} parent=5 // pred_fallthru
      _
  $region6: #{closed_call.4} parent=0 // loop_footer
    %s18 = sadd.s32 1, %s14
  $region7: #{closed_call.4} parent=0 // loop_footer_branch
    %13 = sbr.rel target = $region3
  $region8: #{closed_call.4} parent=0 // loop_exit
    _

</llo_original>
